<compile_context>
chip_gen: v7x
topology: tpu7x:2x2x1
jax: 0.10.0
libtpu: 0.0.40
codegen_flags: <defaults>
</compile_context>

<pallas_src>
import functools
import math

import numpy as np
import jax
import jax.numpy as jnp
from jax import lax
from jax.experimental import pallas as pl
from jax.experimental.pallas import tpu as pltpu


def _rotate_half(v, d2):
    # Permuted (evens-first) layout: [x_e | x_o] -> [x_o | x_e].
    # A D/2 rotation of a D-vector is symmetric, so the shift sign is moot.
    if d2 % 128 == 0:
        return pltpu.roll(v, shift=d2, axis=-1)        # free XLU lane rotate
    return jnp.concatenate([v[:, d2:], v[:, :d2]], axis=-1)


def _global_pointer_kernel(x_ref, wq_ref, wk_ref, bq_ref, bk_ref, *rest,
                           inner_dim, tq, rope):
    """One grid point = (batch bi, ent_type ei, query-tile mi)."""
    D = inner_dim
    d2 = D // 2
    mi = pl.program_id(2)

    if rope:
        cos_ref, sin_ref, out_ref, k_ref = rest
    else:
        out_ref, k_ref = rest

    # ---- K path: project + RoPE the whole (padded) sequence once per (bi, ei).
    @pl.when(mi == 0)
    def _project_k():
        k = jnp.dot(x_ref[0], wk_ref[0],
                    preferred_element_type=jnp.float32) + bk_ref[0]   # (S_pad, D)
        if rope:
            k = k * cos_ref[...] + _rotate_half(k, d2) * sin_ref[...]
        k_ref[...] = k.astype(k_ref.dtype)

    # ---- Q path: project + RoPE just this query tile (uniform per-step work).
    m0 = pl.multiple_of(mi * tq, tq)
    x_tile = x_ref[0, pl.ds(m0, tq), :]                               # (tq, H)
    q = jnp.dot(x_tile, wq_ref[0],
                preferred_element_type=jnp.float32) + bq_ref[0]       # (tq, D) f32
    if rope:
        q = (q * cos_ref[pl.ds(m0, tq), :]
             + _rotate_half(q, d2) * sin_ref[pl.ds(m0, tq), :])
    q = q.astype(k_ref.dtype)

    # logits[m, n] = <q_m, k_n>  (1/sqrt(D) already folded into Wq/bq).
    # Contract the last dims of both operands: native MXU A.B^T, no transpose.
    out_ref[0, 0] = lax.dot_general(
        q, k_ref[...], (((1,), (1,)), ((), ())),
        preferred_element_type=jnp.float32).astype(out_ref.dtype)


def _default_vmem_limit():
    try:
        cap = int(pltpu.get_tpu_info().vmem_capacity_bytes)
    except Exception:
        return 64 * 1024 * 1024
    if cap >= 100 * 1024 * 1024:          # v5e / v6e: 128 MiB physical
        return 100 * 1024 * 1024
    # v7x-class: 64 MiB physical -> leave headroom for XLA's own scratch.
    return max(cap - 12 * 1024 * 1024, 32 * 1024 * 1024)


def _pick_tq(S_pad, H, D, rope, compute_bytes, out_bytes, vmem_limit):
    """Largest query tile whose double-buffered blocks fit the VMEM budget."""
    budget = int(0.75 * vmem_limit)
    fixed = 2 * S_pad * H * compute_bytes            # x block (2 buffers)
    fixed += 2 * 2 * H * D * compute_bytes           # Wq, Wk per-head blocks
    fixed += 2 * 2 * D * 4                           # biases (f32, negligible)
    if rope:
        fixed += 2 * 2 * S_pad * D * compute_bytes   # cos / sin tables
    fixed += S_pad * D * compute_bytes               # K scratch
    cands = sorted({t for t in (128, 256, 384, 512, 640, 768, 896, 1024)
                    if t <= S_pad and S_pad % t == 0}
                   | ({S_pad} if S_pad <= 1024 else set()),
                   reverse=True)
    for t in cands:
        if fixed + 2 * t * S_pad * out_bytes <= budget:
            return t
    return 128


def global_pointer_forward(last_hidden_state, W, b, ent_type_size, inner_dim,
                           rope=True, compute_dtype=jnp.float32,
                           out_dtype=jnp.float32, tq=None,
                           vmem_limit_bytes=None):
    """last_hidden_state: (B, S, H).  W: (H, E*2D).  b: (E*2D,).

    Returns logits of shape (B, E, S, S) in `out_dtype` (use bf16 on
    HBM-bound generations; the kernel is writeback-bound on the S^2 logits).
    """
    B, S, H = last_hidden_state.shape
    E, D = ent_type_size, inner_dim
    assert D % 2 == 0
    scale = 1.0 / math.sqrt(D)

    # ---- split dense weight into per-head q/k; fold 1/sqrt(D) into q side ----
    W_r = jnp.transpose(jnp.asarray(W).reshape(H, E, 2 * D), (1, 0, 2))  # (E,H,2D)
    Wq = W_r[..., :D] * scale
    Wk = W_r[..., D:]
    b_r = jnp.asarray(b).reshape(E, 1, 2 * D)
    bq = b_r[..., :D] * scale
    bk = b_r[..., D:]

    if rope:
        # Permute columns evens-first so interleaved RoPE becomes rotate-half.
        # Same permutation on q and k => logits unchanged.
        perm = np.concatenate([np.arange(0, D, 2), np.arange(1, D, 2)])
        Wq, Wk = Wq[..., perm], Wk[..., perm]
        bq, bk = bq[..., perm], bk[..., perm]

    Wq = Wq.astype(compute_dtype)                     # (E, H, D)
    Wk = Wk.astype(compute_dtype)                     # (E, H, D)
    bq = bq.astype(jnp.float32)                       # (E, 1, D) stays f32
    bk = bk.astype(jnp.float32)

    # ---- pad seq len to a multiple of 128 (lane-dense k axis / x rows) ----
    S_pad = pl.cdiv(S, 128) * 128
    x = last_hidden_state
    if S_pad != S:
        x = jnp.pad(x, ((0, 0), (0, S_pad - S), (0, 0)))
    x = x.astype(compute_dtype)

    inputs = [x, Wq, Wk, bq, bk]
    if rope:
        # cos / signed-sin tables in the permuted (rotate-half) layout.
        pos = jnp.arange(S_pad, dtype=jnp.float32)[:, None]
        idx = jnp.arange(D // 2, dtype=jnp.float32)
        theta = jnp.power(10000.0, -2.0 * idx / D)
        ang = pos * theta                                            # (S_pad, D/2)
        cos_tab = jnp.concatenate([jnp.cos(ang), jnp.cos(ang)], -1).astype(compute_dtype)
        sin_tab = jnp.concatenate([-jnp.sin(ang), jnp.sin(ang)], -1).astype(compute_dtype)
        inputs += [cos_tab, sin_tab]

    # ---- generation-aware VMEM limit + query-tile size ----
    if vmem_limit_bytes is None:
        vmem_limit_bytes = _default_vmem_limit()
    cb = jnp.dtype(compute_dtype).itemsize
    ob = jnp.dtype(out_dtype).itemsize
    if tq is None:
        tq = _pick_tq(S_pad, H, D, rope, cb, ob, vmem_limit_bytes)
    assert S_pad % tq == 0 and tq % 8 == 0
    M = S_pad // tq

    kernel = functools.partial(_global_pointer_kernel,
                               inner_dim=D, tq=tq, rope=rope)

    in_specs = [
        # x: constant over (ei, mi) -> DMA'd only when the batch index changes.
        pl.BlockSpec((1, S_pad, H), lambda bi, ei, mi: (bi, 0, 0)),
        # Per-head weights / biases: only the active head's slice is in VMEM.
        pl.BlockSpec((1, H, D), lambda bi, ei, mi: (ei, 0, 0)),
        pl.BlockSpec((1, H, D), lambda bi, ei, mi: (ei, 0, 0)),
        pl.BlockSpec((1, 1, D), lambda bi, ei, mi: (ei, 0, 0)),
        pl.BlockSpec((1, 1, D), lambda bi, ei, mi: (ei, 0, 0)),
    ]
    if rope:
        in_specs += [pl.BlockSpec((S_pad, D), lambda bi, ei, mi: (0, 0)),
                     pl.BlockSpec((S_pad, D), lambda bi, ei, mi: (0, 0))]

    # Logits are written directly at (B, E, S, S): full tiles are lane-dense
    # unmasked stores; only the ragged final tile (when S % 128 != 0) is a
    # masked store.  No post-kernel slice / extra HBM pass.
    logits = pl.pallas_call(
        kernel,
        out_shape=jax.ShapeDtypeStruct((B, E, S, S), out_dtype),
        grid_spec=pltpu.PrefetchScalarGridSpec(
            num_scalar_prefetch=0,
            grid=(B, E, M),
            in_specs=in_specs,
            out_specs=pl.BlockSpec((1, 1, tq, S_pad),
                                   lambda bi, ei, mi: (bi, ei, mi, 0)),
            scratch_shapes=[pltpu.VMEM((S_pad, D), compute_dtype)],
        ),
        compiler_params=pltpu.CompilerParams(
            # v7x megacore: B and E shard across the 2 TensorCores (keep
            # B*E >= 2); the query-tile axis carries the K scratch.
            dimension_semantics=("parallel", "parallel", "arbitrary"),
            vmem_limit_bytes=int(vmem_limit_bytes)),
    )(*inputs)
    return logits


def global_pointer_reference(x, W, b, ent_type_size, inner_dim, rope=True):
    """Pure-JAX reference mirroring the PyTorch forward (post-encoder)."""
    B, S, H = x.shape
    E, D = ent_type_size, inner_dim
    out = x @ W + b                       # (B, S, E*2D)
    out = out.reshape(B, S, E, 2 * D)     # == split + stack(dim=-2)
    qw, kw = out[..., :D], out[..., D:]
    if rope:
        pos = jnp.arange(S, dtype=jnp.float32)[:, None]
        idx = jnp.arange(D // 2, dtype=jnp.float32)
        theta = jnp.power(10000.0, -2.0 * idx / D)
        ang = pos * theta
        cos_pos = jnp.repeat(jnp.cos(ang), 2, -1)[None, :, None, :]
        sin_pos = jnp.repeat(jnp.sin(ang), 2, -1)[None, :, None, :]

        def rot(v):
            v2 = jnp.stack([-v[..., 1::2], v[..., ::2]], -1).reshape(v.shape)
            return v * cos_pos + v2 * sin_pos

        qw, kw = rot(qw), rot(kw)
    logits = jnp.einsum('bmhd,bnhd->bhmn', qw, kw)
    return logits / (D ** 0.5)


if __name__ == "__main__":
    B, S, H = 2, 8, 32          # batch, seq_len, hidden_size
    E, D = 4, 16                # ent_type_size, inner_dim

    key = jax.random.PRNGKey(0)
    k_x, k_w, k_b = jax.random.split(key, 3)

    # Synthetic "encoder output" and deterministic dense params.
    last_hidden_state = jax.random.normal(k_x, (B, S, H), dtype=jnp.float32)
    W = 0.02 * jax.random.normal(k_w, (H, E * D * 2), dtype=jnp.float32)
    b = 0.02 * jax.random.normal(k_b, (E * D * 2,), dtype=jnp.float32)

    ref = jax.block_until_ready(
        global_pointer_reference(last_hidden_state, W, b, E, D, rope=True))

    # f32 path (default).
    logits = jax.block_until_ready(
        global_pointer_forward(last_hidden_state, W, b, E, D, rope=True))
    assert logits.shape == (B, E, S, S)
    np.testing.assert_allclose(np.asarray(logits), np.asarray(ref),
                               rtol=1e-2, atol=1e-2)

    # bf16 compute + bf16 logits (recommended on v6e/v7x: writeback-bound).
    logits_bf16 = jax.block_until_ready(
        global_pointer_forward(last_hidden_state, W, b, E, D, rope=True,
                               compute_dtype=jnp.bfloat16,
                               out_dtype=jnp.bfloat16))
    np.testing.assert_allclose(np.asarray(logits_bf16.astype(jnp.float32)),
                               np.asarray(ref), rtol=3e-2, atol=3e-2)

    # rope=False path (rotation work + tables skipped entirely).
    logits_nr = jax.block_until_ready(
        global_pointer_forward(last_hidden_state, W, b, E, D, rope=False))
    ref_nr = jax.block_until_ready(
        global_pointer_reference(last_hidden_state, W, b, E, D, rope=False))
    np.testing.assert_allclose(np.asarray(logits_nr), np.asarray(ref_nr),
                               rtol=1e-2, atol=1e-2)

    print("KERNEL_OK")
</pallas_src>

<mosaic_0001>
module attributes {stable_mosaic.version = 11 : i64} {
  func.func @_global_pointer_kernel(%arg0: i32, %arg1: i32, %arg2: i32, %arg3: memref<1x128x32xf32, #tpu.memory_space<vmem>>, %arg4: memref<1x32x16xf32, #tpu.memory_space<vmem>>, %arg5: memref<1x32x16xf32, #tpu.memory_space<vmem>>, %arg6: memref<1x1x16xf32, #tpu.memory_space<vmem>>, %arg7: memref<1x1x16xf32, #tpu.memory_space<vmem>>, %arg8: memref<128x16xf32, #tpu.memory_space<vmem>>, %arg9: memref<128x16xf32, #tpu.memory_space<vmem>>, %arg10: memref<1x1x128x128xf32, #tpu.memory_space<vmem>>, %arg11: memref<128x16xf32, #tpu.memory_space<vmem>>) attributes {dimension_semantics = [#tpu.dimension_semantics<parallel>, #tpu.dimension_semantics<parallel>, #tpu.dimension_semantics<arbitrary>], iteration_bounds = array<i64: 2, 4, 1>, scalar_prefetch = 0 : i64, scratch_operands = 1 : i64, tpu.core_type = #tpu.core_type<tc>, window_params = [{transform_indices = @transform_0, window_bounds = array<i64: 1, 128, 32>}, {transform_indices = @transform_1, window_bounds = array<i64: 1, 32, 16>}, {transform_indices = @transform_2, window_bounds = array<i64: 1, 32, 16>}, {transform_indices = @transform_3, window_bounds = array<i64: 1, 1, 16>}, {transform_indices = @transform_4, window_bounds = array<i64: 1, 1, 16>}, {pipeline_mode = #tpu.pipeline_mode<synchronous>, transform_indices = @transform_5, window_bounds = array<i64: 128, 16>}, {pipeline_mode = #tpu.pipeline_mode<synchronous>, transform_indices = @transform_6, window_bounds = array<i64: 128, 16>}, {transform_indices = @transform_7, window_bounds = array<i64: 1, 1, 128, 128>}]} {
    %c0_i32 = arith.constant 0 : i32
    %0 = arith.cmpi eq, %arg2, %c0_i32 : i32
    %1 = arith.extui %0 : i1 to i32
    %c0_i32_0 = arith.constant 0 : i32
    %2 = arith.cmpi ne, %1, %c0_i32_0 : i32
    scf.if %2 {
      %c0_17 = arith.constant 0 : index
      %c0_18 = arith.constant 0 : index
      %c0_19 = arith.constant 0 : index
      %30 = vector.load %arg3[%c0_17, %c0_18, %c0_19] : memref<1x128x32xf32, #tpu.memory_space<vmem>>, vector<1x128x32xf32>
      %31 = vector.shape_cast %30 : vector<1x128x32xf32> to vector<128x32xf32>
      %c0_20 = arith.constant 0 : index
      %c0_21 = arith.constant 0 : index
      %c0_22 = arith.constant 0 : index
      %32 = vector.load %arg5[%c0_20, %c0_21, %c0_22] : memref<1x32x16xf32, #tpu.memory_space<vmem>>, vector<1x32x16xf32>
      %33 = vector.shape_cast %32 : vector<1x32x16xf32> to vector<32x16xf32>
      %cst_23 = arith.constant dense<0.000000e+00> : vector<128x16xf32>
      %34 = tpu.matmul %31, %33, %cst_23 {dimension_numbers = #tpu.dot_dimension_numbers<[1], [0], [0], [1], [0, 0, 1, 1], [], []>} : vector<128x32xf32>, vector<32x16xf32>, vector<128x16xf32> -> vector<128x16xf32>
      %c0_24 = arith.constant 0 : index
      %c0_25 = arith.constant 0 : index
      %c0_26 = arith.constant 0 : index
      %35 = vector.load %arg7[%c0_24, %c0_25, %c0_26] : memref<1x1x16xf32, #tpu.memory_space<vmem>>, vector<1x1x16xf32>
      %36 = vector.shape_cast %35 : vector<1x1x16xf32> to vector<1x16xf32>
      %37 = vector.broadcast %36 : vector<1x16xf32> to vector<128x16xf32>
      %38 = arith.addf %34, %37 : vector<128x16xf32>
      %c0_27 = arith.constant 0 : index
      %c0_28 = arith.constant 0 : index
      %39 = vector.load %arg8[%c0_27, %c0_28] : memref<128x16xf32, #tpu.memory_space<vmem>>, vector<128x16xf32>
      %40 = arith.mulf %38, %39 : vector<128x16xf32>
      %41 = vector.extract_strided_slice %38 {offsets = [0, 8], sizes = [128, 8], strides = [1, 1]} : vector<128x16xf32> to vector<128x8xf32>
      %42 = vector.extract_strided_slice %38 {offsets = [0, 0], sizes = [128, 8], strides = [1, 1]} : vector<128x16xf32> to vector<128x8xf32>
      %43 = tpu.concatenate %41, %42 in 1 : vector<128x8xf32>, vector<128x8xf32> -> vector<128x16xf32>
      %c0_29 = arith.constant 0 : index
      %c0_30 = arith.constant 0 : index
      %44 = vector.load %arg9[%c0_29, %c0_30] : memref<128x16xf32, #tpu.memory_space<vmem>>, vector<128x16xf32>
      %45 = arith.mulf %43, %44 : vector<128x16xf32>
      %46 = arith.addf %40, %45 : vector<128x16xf32>
      %c0_31 = arith.constant 0 : index
      %c0_32 = arith.constant 0 : index
      %47 = vector.load %arg11[%c0_31, %c0_32] : memref<128x16xf32, #tpu.memory_space<vmem>>, vector<128x16xf32>
      tpu.vector_store %arg11[%c0_31, %c0_32], %46 {strides = array<i32>} : memref<128x16xf32, #tpu.memory_space<vmem>>, vector<128x16xf32>,
    } else {
    }
    %c128_i32 = arith.constant 128 : i32
    %3 = arith.muli %arg2, %c128_i32 : i32
    %4 = tpu.assume_multiple %3, 128 : i32
    %c0 = arith.constant 0 : index
    %5 = arith.index_cast %4 : i32 to index
    %c0_1 = arith.constant 0 : index
    %6 = vector.load %arg3[%c0, %5, %c0_1] : memref<1x128x32xf32, #tpu.memory_space<vmem>>, vector<1x128x32xf32>
    %7 = vector.shape_cast %6 : vector<1x128x32xf32> to vector<128x32xf32>
    %c0_2 = arith.constant 0 : index
    %c0_3 = arith.constant 0 : index
    %c0_4 = arith.constant 0 : index
    %8 = vector.load %arg4[%c0_2, %c0_3, %c0_4] : memref<1x32x16xf32, #tpu.memory_space<vmem>>, vector<1x32x16xf32>
    %9 = vector.shape_cast %8 : vector<1x32x16xf32> to vector<32x16xf32>
    %cst = arith.constant dense<0.000000e+00> : vector<128x16xf32>
    %10 = tpu.matmul %7, %9, %cst {dimension_numbers = #tpu.dot_dimension_numbers<[1], [0], [0], [1], [0, 0, 1, 1], [], []>} : vector<128x32xf32>, vector<32x16xf32>, vector<128x16xf32> -> vector<128x16xf32>
    %c0_5 = arith.constant 0 : index
    %c0_6 = arith.constant 0 : index
    %c0_7 = arith.constant 0 : index
    %11 = vector.load %arg6[%c0_5, %c0_6, %c0_7] : memref<1x1x16xf32, #tpu.memory_space<vmem>>, vector<1x1x16xf32>
    %12 = vector.shape_cast %11 : vector<1x1x16xf32> to vector<1x16xf32>
    %13 = vector.broadcast %12 : vector<1x16xf32> to vector<128x16xf32>
    %14 = arith.addf %10, %13 : vector<128x16xf32>
    %15 = arith.index_cast %4 : i32 to index
    %c0_8 = arith.constant 0 : index
    %16 = vector.load %arg8[%15, %c0_8] : memref<128x16xf32, #tpu.memory_space<vmem>>, vector<128x16xf32>
    %17 = arith.mulf %14, %16 : vector<128x16xf32>
    %18 = vector.extract_strided_slice %14 {offsets = [0, 8], sizes = [128, 8], strides = [1, 1]} : vector<128x16xf32> to vector<128x8xf32>
    %19 = vector.extract_strided_slice %14 {offsets = [0, 0], sizes = [128, 8], strides = [1, 1]} : vector<128x16xf32> to vector<128x8xf32>
    %20 = tpu.concatenate %18, %19 in 1 : vector<128x8xf32>, vector<128x8xf32> -> vector<128x16xf32>
    %21 = arith.index_cast %4 : i32 to index
    %c0_9 = arith.constant 0 : index
    %22 = vector.load %arg9[%21, %c0_9] : memref<128x16xf32, #tpu.memory_space<vmem>>, vector<128x16xf32>
    %23 = arith.mulf %20, %22 : vector<128x16xf32>
    %24 = arith.addf %17, %23 : vector<128x16xf32>
    %c0_10 = arith.constant 0 : index
    %c0_11 = arith.constant 0 : index
    %25 = vector.load %arg11[%c0_10, %c0_11] : memref<128x16xf32, #tpu.memory_space<vmem>>, vector<128x16xf32>
    %cst_12 = arith.constant dense<0.000000e+00> : vector<128x128xf32>
    %26 = tpu.matmul %24, %25, %cst_12 {dimension_numbers = #tpu.dot_dimension_numbers<[1], [1], [0], [0], [0, 0, 1, 0], [], []>} : vector<128x16xf32>, vector<128x16xf32>, vector<128x128xf32> -> vector<128x128xf32>
    %c0_13 = arith.constant 0 : index
    %c0_14 = arith.constant 0 : index
    %c0_15 = arith.constant 0 : index
    %c0_16 = arith.constant 0 : index
    %27 = vector.load %arg10[%c0_13, %c0_14, %c0_15, %c0_16] : memref<1x1x128x128xf32, #tpu.memory_space<vmem>>, vector<1x1x128x128xf32>
    %28 = vector.shape_cast %27 : vector<1x1x128x128xf32> to vector<128x128xf32>
    %29 = vector.shape_cast %26 : vector<128x128xf32> to vector<1x1x128x128xf32>
    tpu.vector_store %arg10[%c0_13, %c0_14, %c0_15, %c0_16], %29 {strides = array<i32>} : memref<1x1x128x128xf32, #tpu.memory_space<vmem>>, vector<1x1x128x128xf32>,
    return
  }
  func.func @transform_0(%arg0: i32, %arg1: i32, %arg2: i32) -> (i32, i32, i32) {
    %c0_i32 = arith.constant 0 : i32
    %c0_i32_0 = arith.constant 0 : i32
    %c0_i32_1 = arith.constant 0 : i32
    return %arg0, %c0_i32, %c0_i32_0 : i32, i32, i32
  }
  func.func @transform_1(%arg0: i32, %arg1: i32, %arg2: i32) -> (i32, i32, i32) {
    %c0_i32 = arith.constant 0 : i32
    %c0_i32_0 = arith.constant 0 : i32
    %c0_i32_1 = arith.constant 0 : i32
    return %arg1, %c0_i32, %c0_i32_0 : i32, i32, i32
  }
  func.func @transform_2(%arg0: i32, %arg1: i32, %arg2: i32) -> (i32, i32, i32) {
    %c0_i32 = arith.constant 0 : i32
    %c0_i32_0 = arith.constant 0 : i32
    %c0_i32_1 = arith.constant 0 : i32
    return %arg1, %c0_i32, %c0_i32_0 : i32, i32, i32
  }
  func.func @transform_3(%arg0: i32, %arg1: i32, %arg2: i32) -> (i32, i32, i32) {
    %c0_i32 = arith.constant 0 : i32
    %c0_i32_0 = arith.constant 0 : i32
    %c0_i32_1 = arith.constant 0 : i32
    return %arg1, %c0_i32, %c0_i32_0 : i32, i32, i32
  }
  func.func @transform_4(%arg0: i32, %arg1: i32, %arg2: i32) -> (i32, i32, i32) {
    %c0_i32 = arith.constant 0 : i32
    %c0_i32_0 = arith.constant 0 : i32
    %c0_i32_1 = arith.constant 0 : i32
    return %arg1, %c0_i32, %c0_i32_0 : i32, i32, i32
  }
  func.func @transform_5(%arg0: i32, %arg1: i32, %arg2: i32) -> (i32, i32) {
    %c0_i32 = arith.constant 0 : i32
    %c0_i32_0 = arith.constant 0 : i32
    %c0_i32_1 = arith.constant 0 : i32
    return %c0_i32, %c0_i32_0 : i32, i32
  }
  func.func @transform_6(%arg0: i32, %arg1: i32, %arg2: i32) -> (i32, i32) {
    %c0_i32 = arith.constant 0 : i32
    %c0_i32_0 = arith.constant 0 : i32
    %c0_i32_1 = arith.constant 0 : i32
    return %c0_i32, %c0_i32_0 : i32, i32
  }
  func.func @transform_7(%arg0: i32, %arg1: i32, %arg2: i32) -> (i32, i32, i32, i32) {
    %c0_i32 = arith.constant 0 : i32
    %c0_i32_0 = arith.constant 0 : i32
    return %arg0, %arg1, %arg2, %c0_i32 : i32, i32, i32, i32
  }
}

</mosaic_0001>

<llo_original>
// kernel: tpu_custom_call.1
$region0: #{tpu_custom_call.1}
  #allocation0 [shape = 'u32[]', space=smem, size = 0x4, offset = 0x4, fixed_abs, tag = 'smem constant byte address 0x4 - core index']
  #allocation1 [shape = 'u32[144,128]{1,0:T(1,128)}', space=vmem, size = 0x12000, scoped, tag = 'internal scratch']
  #allocation2 [shape = 'f32[128,16]{1,0:T(8,128)}', space=vmem, size = 0x10000, scoped, tag = 'scratch operand']
  %s0 = inlined_call_operand.hbm [shape: f32[2,128,32], index: 0, kind: input, shape index: {}]
  %s1 = inlined_call_operand.hbm [shape: f32[4,32,16], index: 1, kind: input, shape index: {}]
  %s2 = inlined_call_operand.hbm [shape: f32[4,32,16], index: 2, kind: input, shape index: {}]
  %s3 = inlined_call_operand.hbm [shape: f32[4,1,16], index: 3, kind: input, shape index: {}]
  %s4 = inlined_call_operand.hbm [shape: f32[4,1,16], index: 4, kind: input, shape index: {}]
  %s5 = inlined_call_operand.hbm [shape: f32[128,16], index: 5, kind: input, shape index: {}]
  %s6 = inlined_call_operand.hbm [shape: f32[128,16], index: 6, kind: input, shape index: {}]
  %s7 = inlined_call_operand.hbm [shape: f32[2,4,8,8], index: 7, kind: output, shape index: {}]
  %s8 = sld [smem:[#allocation0]]
  $region93: #{tpu_custom_call.1} parent=0
    _
  %s10 = ssub.s32 1, %s8
  %s11 = scalar_select 0, %s10, %s8
  $region1: #{tpu_custom_call.1} parent=0
    #allocation3 [shape = 'u8[131072]{0}', space=vmem, size = 0x20000, scoped, tag = 'input window, operand 0']
    #allocation4 [shape = 's32[2]{0}', space=sflag, size = 0x8, scoped, tag = 'scoped memory for tpu_custom_call.1']
    #allocation5 [shape = 's32[2]{0}', space=sflag, size = 0x8, scoped, tag = 'scoped memory for tpu_custom_call.1']
    #allocation6 [shape = 'u8[32768]{0}', space=vmem, size = 0x8000, scoped, tag = 'input window, operand 1']
    #allocation7 [shape = 's32[2]{0}', space=sflag, size = 0x8, scoped, tag = 'scoped memory for tpu_custom_call.1']
    #allocation8 [shape = 'u8[32768]{0}', space=vmem, size = 0x8000, scoped, tag = 'input window, operand 2']
    #allocation9 [shape = 'u8[1024]{0}', space=vmem, size = 0x400, scoped, tag = 'input window, operand 3']
    #allocation10 [shape = 's32[2]{0}', space=sflag, size = 0x8, scoped, tag = 'scoped memory for tpu_custom_call.1']
    #allocation11 [shape = 'u8[1024]{0}', space=vmem, size = 0x400, scoped, tag = 'input window, operand 4']
    #allocation12 [shape = 'u8[65536]{0}', space=vmem, size = 0x10000, scoped, tag = 'input window, operand 5, single buffered']
    #allocation13 [shape = 's32[1]{0}', space=sflag, size = 0x4, scoped, tag = 'scoped memory for tpu_custom_call.1']
    #allocation14 [shape = 'u8[65536]{0}', space=vmem, size = 0x10000, scoped, tag = 'input window, operand 6, single buffered']
    #allocation15 [shape = 'u8[131072]{0}', space=vmem, size = 0x20000, scoped, tag = 'output window, operand 0']
    %12 = vsyncpa [#allocation4], 0
    %s13 = scalar_lea.sflag [#allocation4], 1
    %14 = vsyncpa %s13, 0
    %15 = vsyncpa [#allocation7], 0
    %s16 = scalar_lea.sflag [#allocation7], 1
    %17 = vsyncpa %s16, 0
    %18 = vsyncpa [#allocation10], 0
    %s19 = scalar_lea.sflag [#allocation10], 1
    %20 = vsyncpa %s19, 0
    %21 = vsyncpa [#allocation13], 0
    %22 = vsyncpa [#allocation5], 0
    %s23 = scalar_lea.sflag [#allocation5], 1
    %24 = vsyncpa %s23, 0
    loop: start=0, step=1, limit=10
    $region2: #{tpu_custom_call.1} parent=1 // loop_pre_header
      _
    $region3: #{tpu_custom_call.1} parent=1 // loop_header
      %s26 = sphi 0, %s30
      %p27 = scmp.ge.s32.totalorder %s26, 10
      %s33 = sphi 0, %s52
      %s34 = sphi 0, %s48
      %s35 = sphi 0, %s44
      %s36 = sphi 0, %s33
      %s37 = sphi 0, %s34
      %s38 = sphi 0, %s35
      %s39 = sphi 0, %s36
      %s40 = sphi 0, %s37
      %s41 = sphi 0, %s38
      %s55 = sphi 0, %s57
      %s58 = sphi 0, %s55
      %s59 = sphi 0, %s58
      %s75 = sphi 0, %s59
      %s81 = sphi 0, %s83
      %s84 = sphi 0, %s81
      %s85 = sphi 0, %s84
      %s101 = sphi 0, %s85
      %s107 = sphi 0, %s109
      %s110 = sphi 0, %s107
      %s111 = sphi 0, %s110
      %s127 = sphi 0, %s111
      %s133 = sphi 0, %s135
      %s136 = sphi 0, %s133
      %s137 = sphi 0, %s136
      %s153 = sphi 0, %s137
      %s159 = sphi 0, %s161
      %s162 = sphi 0, %s159
      %s163 = sphi 0, %s162
      %s179 = sphi 0, %s163
      %s183 = sphi 0, %s183
      %s185 = sphi 0, %s183
      %s186 = sphi 0, %s185
      %s200 = sphi 0, %s186
      %s204 = sphi 0, %s204
      %s206 = sphi 0, %s204
      %s207 = sphi 0, %s206
      %s221 = sphi 0, %s207
      %s231 = sphi 0, %s233
      %s234 = sphi 0, %s231
      %s235 = sphi 0, %s234
      %s251 = sphi 0, %s235
    $region4: #{tpu_custom_call.1} parent=1 // loop_header_branch
      %29 = sbr.rel (%p27) target = $region8
    $region5: #{tpu_custom_call.1} parent=1 // loop_body
      %s31 = ssub.s32 %s26, 1
      %s32 = ssub.s32 %s26, 2
      %s42 = sadd.s32 1, %s35
      %p43 = scmp.ge.s32.totalorder %s42, 1
      %s44 = scalar_select %p43, 0, %s42
      %s45 = sadd.s32 1, %s34
      %s46 = scalar_select %p43, %s45, %s34
      %p47 = scmp.ge.s32.totalorder %s46, 4
      %s48 = scalar_select %p47, 0, %s46
      %s49 = sadd.s32 1, %s33
      %s50 = scalar_select %p47, %s49, %s33
      %p51 = scmp.ge.s32.totalorder %s50, 2
      %s52 = scalar_select %p51, 0, %s50
      %s53 = ssub.s32 %s33, %s52
      %p54 = scmp.eq.s32.totalorder %s53, 0
      %s56 = sadd.s32 %s55, 1
      %s57 = scalar_select %p54, %s55, %s56
      %p60 = pneg %p54
      %p61 = scmp.eq.s32.totalorder %s26, 7
      %p62 = por %p60, %p61
      %p63 = scmp.ne.s32.totalorder %s55, %s58
      %p64 = scmp.eq.s32.totalorder %s26, 0
      %p65 = por %p63, %p64
      %p66 = scmp.ne.s32.totalorder %s55, %s58
      %p67 = scmp.eq.s32.totalorder %s31, 7
      %p68 = por %p66, %p67
      %p69 = scmp.ne.s32.totalorder %s58, %s59
      %p70 = scmp.eq.s32.totalorder %s31, 0
      %p71 = por %p69, %p70
      %p72 = scmp.ne.s32.totalorder %s58, %s59
      %p73 = scmp.eq.s32.totalorder %s32, 7
      %p74 = por %p72, %p73
      %p76 = scmp.ne.s32.totalorder %s59, %s75
      %p77 = scmp.eq.s32.totalorder %s32, 0
      %p78 = por %p76, %p77
      %s79 = ssub.s32 %s34, %s48
      %p80 = scmp.eq.s32.totalorder %s79, 0
      %s82 = sadd.s32 %s81, 1
      %s83 = scalar_select %p80, %s81, %s82
      %p86 = pneg %p80
      %p87 = scmp.eq.s32.totalorder %s26, 7
      %p88 = por %p86, %p87
      %p89 = scmp.ne.s32.totalorder %s81, %s84
      %p90 = scmp.eq.s32.totalorder %s26, 0
      %p91 = por %p89, %p90
      %p92 = scmp.ne.s32.totalorder %s81, %s84
      %p93 = scmp.eq.s32.totalorder %s31, 7
      %p94 = por %p92, %p93
      %p95 = scmp.ne.s32.totalorder %s84, %s85
      %p96 = scmp.eq.s32.totalorder %s31, 0
      %p97 = por %p95, %p96
      %p98 = scmp.ne.s32.totalorder %s84, %s85
      %p99 = scmp.eq.s32.totalorder %s32, 7
      %p100 = por %p98, %p99
      %p102 = scmp.ne.s32.totalorder %s85, %s101
      %p103 = scmp.eq.s32.totalorder %s32, 0
      %p104 = por %p102, %p103
      %s105 = ssub.s32 %s34, %s48
      %p106 = scmp.eq.s32.totalorder %s105, 0
      %s108 = sadd.s32 %s107, 1
      %s109 = scalar_select %p106, %s107, %s108
      %p112 = pneg %p106
      %p113 = scmp.eq.s32.totalorder %s26, 7
      %p114 = por %p112, %p113
      %p115 = scmp.ne.s32.totalorder %s107, %s110
      %p116 = scmp.eq.s32.totalorder %s26, 0
      %p117 = por %p115, %p116
      %p118 = scmp.ne.s32.totalorder %s107, %s110
      %p119 = scmp.eq.s32.totalorder %s31, 7
      %p120 = por %p118, %p119
      %p121 = scmp.ne.s32.totalorder %s110, %s111
      %p122 = scmp.eq.s32.totalorder %s31, 0
      %p123 = por %p121, %p122
      %p124 = scmp.ne.s32.totalorder %s110, %s111
      %p125 = scmp.eq.s32.totalorder %s32, 7
      %p126 = por %p124, %p125
      %p128 = scmp.ne.s32.totalorder %s111, %s127
      %p129 = scmp.eq.s32.totalorder %s32, 0
      %p130 = por %p128, %p129
      %s131 = ssub.s32 %s34, %s48
      %p132 = scmp.eq.s32.totalorder %s131, 0
      %s134 = sadd.s32 %s133, 1
      %s135 = scalar_select %p132, %s133, %s134
      %p138 = pneg %p132
      %p139 = scmp.eq.s32.totalorder %s26, 7
      %p140 = por %p138, %p139
      %p141 = scmp.ne.s32.totalorder %s133, %s136
      %p142 = scmp.eq.s32.totalorder %s26, 0
      %p143 = por %p141, %p142
      %p144 = scmp.ne.s32.totalorder %s133, %s136
      %p145 = scmp.eq.s32.totalorder %s31, 7
      %p146 = por %p144, %p145
      %p147 = scmp.ne.s32.totalorder %s136, %s137
      %p148 = scmp.eq.s32.totalorder %s31, 0
      %p149 = por %p147, %p148
      %p150 = scmp.ne.s32.totalorder %s136, %s137
      %p151 = scmp.eq.s32.totalorder %s32, 7
      %p152 = por %p150, %p151
      %p154 = scmp.ne.s32.totalorder %s137, %s153
      %p155 = scmp.eq.s32.totalorder %s32, 0
      %p156 = por %p154, %p155
      %s157 = ssub.s32 %s34, %s48
      %p158 = scmp.eq.s32.totalorder %s157, 0
      %s160 = sadd.s32 %s159, 1
      %s161 = scalar_select %p158, %s159, %s160
      %p164 = pneg %p158
      %p165 = scmp.eq.s32.totalorder %s26, 7
      %p166 = por %p164, %p165
      %p167 = scmp.ne.s32.totalorder %s159, %s162
      %p168 = scmp.eq.s32.totalorder %s26, 0
      %p169 = por %p167, %p168
      %p170 = scmp.ne.s32.totalorder %s159, %s162
      %p171 = scmp.eq.s32.totalorder %s31, 7
      %p172 = por %p170, %p171
      %p173 = scmp.ne.s32.totalorder %s162, %s163
      %p174 = scmp.eq.s32.totalorder %s31, 0
      %p175 = por %p173, %p174
      %p176 = scmp.ne.s32.totalorder %s162, %s163
      %p177 = scmp.eq.s32.totalorder %s32, 7
      %p178 = por %p176, %p177
      %p180 = scmp.ne.s32.totalorder %s163, %s179
      %p181 = scmp.eq.s32.totalorder %s32, 0
      %p182 = por %p180, %p181
      %s184 = sadd.s32 %s183, 1
      %p187 = scmp.eq.s32.totalorder %s26, 7
      %p188 = scmp.ne.s32.totalorder %s183, %s185
      %p189 = scmp.eq.s32.totalorder %s26, 0
      %p190 = por %p188, %p189
      %p191 = scmp.ne.s32.totalorder %s183, %s185
      %p192 = scmp.eq.s32.totalorder %s31, 7
      %p193 = por %p191, %p192
      %p194 = scmp.ne.s32.totalorder %s185, %s186
      %p195 = scmp.eq.s32.totalorder %s31, 0
      %p196 = por %p194, %p195
      %p197 = scmp.ne.s32.totalorder %s185, %s186
      %p198 = scmp.eq.s32.totalorder %s32, 7
      %p199 = por %p197, %p198
      %p201 = scmp.ne.s32.totalorder %s186, %s200
      %p202 = scmp.eq.s32.totalorder %s32, 0
      %p203 = por %p201, %p202
      %s205 = sadd.s32 %s204, 1
      %p208 = scmp.eq.s32.totalorder %s26, 7
      %p209 = scmp.ne.s32.totalorder %s204, %s206
      %p210 = scmp.eq.s32.totalorder %s26, 0
      %p211 = por %p209, %p210
      %p212 = scmp.ne.s32.totalorder %s204, %s206
      %p213 = scmp.eq.s32.totalorder %s31, 7
      %p214 = por %p212, %p213
      %p215 = scmp.ne.s32.totalorder %s206, %s207
      %p216 = scmp.eq.s32.totalorder %s31, 0
      %p217 = por %p215, %p216
      %p218 = scmp.ne.s32.totalorder %s206, %s207
      %p219 = scmp.eq.s32.totalorder %s32, 7
      %p220 = por %p218, %p219
      %p222 = scmp.ne.s32.totalorder %s207, %s221
      %p223 = scmp.eq.s32.totalorder %s32, 0
      %p224 = por %p222, %p223
      %s225 = ssub.s32 %s33, %s52
      %s226 = ssub.s32 %s34, %s48
      %s227 = sor.u32 %s225, %s226
      %s228 = ssub.s32 %s35, %s44
      %s229 = sor.u32 %s227, %s228
      %p230 = scmp.eq.s32.totalorder %s229, 0
      %s232 = sadd.s32 %s231, 1
      %s233 = scalar_select %p230, %s231, %s232
      %p236 = pneg %p230
      %p237 = scmp.eq.s32.totalorder %s26, 7
      %p238 = por %p236, %p237
      %p239 = scmp.ne.s32.totalorder %s231, %s234
      %p240 = scmp.eq.s32.totalorder %s26, 0
      %p241 = por %p239, %p240
      %p242 = scmp.ne.s32.totalorder %s231, %s234
      %p243 = scmp.eq.s32.totalorder %s31, 7
      %p244 = por %p242, %p243
      %p245 = scmp.ne.s32.totalorder %s234, %s235
      %p246 = scmp.eq.s32.totalorder %s31, 0
      %p247 = por %p245, %p246
      %p248 = scmp.ne.s32.totalorder %s234, %s235
      %p249 = scmp.eq.s32.totalorder %s32, 7
      %p250 = por %p248, %p249
      %p252 = scmp.ne.s32.totalorder %s235, %s251
      %p253 = scmp.eq.s32.totalorder %s32, 0
      %p254 = por %p252, %p253
      %p255 = scmp.le.s32.totalorder 1, %s26
      %p256 = scmp.lt.s32.totalorder %s26, 9
      %p257 = pnand %p255, %p256
      %p258 = pneg %p257
      // Predicated region
      $region9: #{tpu_custom_call.1} parent=5 // pred_check
        _
      $region10: #{tpu_custom_call.1} parent=5 // pred_check_branch
        %260 = sbr.rel (%p257) target = $region12
      $region11: #{tpu_custom_call.1} parent=5 // pred_region
        %s261 = ssub.s32 %s26, 1
        // Predicated region
        $region13: #{tpu_custom_call.1} parent=11 // pred_check
          %p262 = pneg %p196
        $region14: #{tpu_custom_call.1} parent=11 // pred_check_branch
          %264 = sbr.rel (%p262) target = $region16
        $region15: #{tpu_custom_call.1} parent=11 // pred_region
          %s266 = ssub.s32 2048, 2048
          %267 = vsyncadd [#allocation13], %s266
          %s268 = sshll.u32 [#allocation12], 4
          %s269 = int_to_ptr.vmem [resolvable:$true] %s268
          %274 = dma.hbm_to_vmem [thread:$0]  %s5, 2048, %s269, [#allocation13], 128, 128, 8
        $region16: #{tpu_custom_call.1} parent=11 // pred_fallthru
          _
        // Predicated region
        $region17: #{tpu_custom_call.1} parent=11 // pred_check
          %p275 = pneg %p217
        $region18: #{tpu_custom_call.1} parent=11 // pred_check_branch
          %277 = sbr.rel (%p275) target = $region20
        $region19: #{tpu_custom_call.1} parent=11 // pred_region
          %s279 = ssub.s32 2048, 2048
          %280 = vsyncadd [#allocation13], %s279
          %s281 = sshll.u32 [#allocation14], 4
          %s282 = int_to_ptr.vmem [resolvable:$true] %s281
          %287 = dma.hbm_to_vmem [thread:$0]  %s6, 2048, %s282, [#allocation13], 128, 128, 8
        $region20: #{tpu_custom_call.1} parent=11 // pred_fallthru
          _
      $region12: #{tpu_custom_call.1} parent=5 // pred_fallthru
        _
      %p288 = scmp.lt.s32.totalorder %s26, 8
      // Predicated region
      $region21: #{tpu_custom_call.1} parent=5 // pred_check
        %p289 = pneg %p288
      $region22: #{tpu_custom_call.1} parent=5 // pred_check_branch
        %291 = sbr.rel (%p289) target = $region24
      $region23: #{tpu_custom_call.1} parent=5 // pred_region
        // Predicated region
        $region25: #{tpu_custom_call.1} parent=23 // pred_check
          %p292 = pneg %p65
        $region26: #{tpu_custom_call.1} parent=23 // pred_check_branch
          %294 = sbr.rel (%p292) target = $region28
        $region27: #{tpu_custom_call.1} parent=23 // pred_region
          %s295 = sand.u32 %s55, 1
          %s296 = scalar_lea.sflag [#allocation4], %s295
          %s297 = sand.u32 %s55, 1
          %s298 = smul.addr %s297, 128
          %s299 = scalar_lea.vmem [#allocation3], %s298
          %s301 = ssub.s32 2048, 2048
          %302 = vsyncadd %s296, %s301
          %s303 = smul.addr %s33, 16
          %s304 = smul.addr %s303, 128
          %s305 = scalar_lea.hbm %s0, %s304
          %s306 = sshll.u32 %s299, 4
          %s307 = int_to_ptr.vmem [resolvable:$true] %s306
          %312 = dma.hbm_to_vmem [thread:$0]  %s305, 2048, %s307, %s296, 128, 128, 8
        $region28: #{tpu_custom_call.1} parent=23 // pred_fallthru
          _
        // Predicated region
        $region29: #{tpu_custom_call.1} parent=23 // pred_check
          %p313 = pneg %p91
        $region30: #{tpu_custom_call.1} parent=23 // pred_check_branch
          %315 = sbr.rel (%p313) target = $region32
        $region31: #{tpu_custom_call.1} parent=23 // pred_region
          %s316 = sand.u32 %s26, 1
          %s317 = scalar_lea.sflag [#allocation7], %s316
          %s318 = sand.u32 %s81, 1
          %s319 = smul.addr %s318, 32
          %s320 = scalar_lea.vmem [#allocation6], %s319
          %s322 = ssub.s32 512, 512
          %323 = vsyncadd %s317, %s322
          %s324 = smul.addr %s34, 4
          %s325 = smul.addr %s324, 128
          %s326 = scalar_lea.hbm %s1, %s325
          %s327 = sshll.u32 %s320, 4
          %s328 = int_to_ptr.vmem [resolvable:$true] %s327
          %333 = dma.hbm_to_vmem [thread:$0]  %s326, 512, %s328, %s317, 128, 128, 8
        $region32: #{tpu_custom_call.1} parent=23 // pred_fallthru
          _
        // Predicated region
        $region33: #{tpu_custom_call.1} parent=23 // pred_check
          %p334 = pneg %p117
        $region34: #{tpu_custom_call.1} parent=23 // pred_check_branch
          %336 = sbr.rel (%p334) target = $region36
        $region35: #{tpu_custom_call.1} parent=23 // pred_region
          %s337 = sand.u32 %s26, 1
          %s338 = scalar_lea.sflag [#allocation7], %s337
          %s339 = sand.u32 %s107, 1
          %s340 = smul.addr %s339, 32
          %s341 = scalar_lea.vmem [#allocation8], %s340
          %s343 = ssub.s32 512, 512
          %344 = vsyncadd %s338, %s343
          %s345 = smul.addr %s34, 4
          %s346 = smul.addr %s345, 128
          %s347 = scalar_lea.hbm %s2, %s346
          %s348 = sshll.u32 %s341, 4
          %s349 = int_to_ptr.vmem [resolvable:$true] %s348
          %354 = dma.hbm_to_vmem [thread:$0]  %s347, 512, %s349, %s338, 128, 128, 8
        $region36: #{tpu_custom_call.1} parent=23 // pred_fallthru
          _
        // Predicated region
        $region37: #{tpu_custom_call.1} parent=23 // pred_check
          %p355 = pneg %p143
        $region38: #{tpu_custom_call.1} parent=23 // pred_check_branch
          %357 = sbr.rel (%p355) target = $region40
        $region39: #{tpu_custom_call.1} parent=23 // pred_region
          %s358 = sand.u32 %s26, 1
          %s359 = scalar_lea.sflag [#allocation10], %s358
          %s360 = sand.u32 %s133, 1
          %s361 = scalar_lea.vmem [#allocation9], %s360
          %s363 = ssub.s32 16, 16
          %364 = vsyncadd %s359, %s363
          %s365 = smul.addr %s34, 16
          %s366 = scalar_lea.hbm %s3, %s365
          %s368 = sshll.u32 %s361, 4
          %s369 = int_to_ptr.vmem [resolvable:$true] %s368
          %371 = dma.hbm_to_vmem [thread:$0]  %s366, 16, %s369, %s359
        $region40: #{tpu_custom_call.1} parent=23 // pred_fallthru
          _
        // Predicated region
        $region41: #{tpu_custom_call.1} parent=23 // pred_check
          %p372 = pneg %p169
        $region42: #{tpu_custom_call.1} parent=23 // pred_check_branch
          %374 = sbr.rel (%p372) target = $region44
        $region43: #{tpu_custom_call.1} parent=23 // pred_region
          %s375 = sand.u32 %s26, 1
          %s376 = scalar_lea.sflag [#allocation10], %s375
          %s377 = sand.u32 %s159, 1
          %s378 = scalar_lea.vmem [#allocation11], %s377
          %s380 = ssub.s32 16, 16
          %381 = vsyncadd %s376, %s380
          %s382 = smul.addr %s34, 16
          %s383 = scalar_lea.hbm %s4, %s382
          %s385 = sshll.u32 %s378, 4
          %s386 = int_to_ptr.vmem [resolvable:$true] %s385
          %388 = dma.hbm_to_vmem [thread:$0]  %s383, 16, %s386, %s376
        $region44: #{tpu_custom_call.1} parent=23 // pred_fallthru
          _
      $region24: #{tpu_custom_call.1} parent=5 // pred_fallthru
        _
      %p389 = scmp.le.s32.totalorder 1, %s26
      %p390 = scmp.lt.s32.totalorder %s26, 9
      %p391 = pnand %p389, %p390
      %p392 = pneg %p391
      // Predicated region
      $region45: #{tpu_custom_call.1} parent=5 // pred_check
        _
      $region46: #{tpu_custom_call.1} parent=5 // pred_check_branch
        %394 = sbr.rel (%p391) target = $region48
      $region47: #{tpu_custom_call.1} parent=5 // pred_region
        %s395 = ssub.s32 %s26, 1
        %s396 = sand.u32 %s58, 1
        %s397 = scalar_lea.sflag [#allocation4], %s396
        %s398 = sand.u32 %s58, 1
        %s399 = smul.addr %s398, 128
        %s400 = scalar_lea.vmem [#allocation3], %s399
        // Predicated region
        $region49: #{tpu_custom_call.1} parent=47 // pred_check
          %p401 = pneg %p71
        $region50: #{tpu_custom_call.1} parent=47 // pred_check_branch
          %403 = sbr.rel (%p401) target = $region52
        $region51: #{tpu_custom_call.1} parent=47 // pred_region
          %404 = dma.done %s397, 2048
        $region52: #{tpu_custom_call.1} parent=47 // pred_fallthru
          _
        %s405 = sand.u32 %s31, 1
        %s406 = scalar_lea.sflag [#allocation7], %s405
        %s407 = sand.u32 %s84, 1
        %s408 = smul.addr %s407, 32
        %s409 = scalar_lea.vmem [#allocation6], %s408
        // Predicated region
        $region53: #{tpu_custom_call.1} parent=47 // pred_check
          %p410 = pneg %p97
        $region54: #{tpu_custom_call.1} parent=47 // pred_check_branch
          %412 = sbr.rel (%p410) target = $region56
        $region55: #{tpu_custom_call.1} parent=47 // pred_region
          %413 = dma.done %s406, 512
        $region56: #{tpu_custom_call.1} parent=47 // pred_fallthru
          _
        %s414 = sand.u32 %s31, 1
        %s415 = scalar_lea.sflag [#allocation7], %s414
        %s416 = sand.u32 %s110, 1
        %s417 = smul.addr %s416, 32
        %s418 = scalar_lea.vmem [#allocation8], %s417
        // Predicated region
        $region57: #{tpu_custom_call.1} parent=47 // pred_check
          %p419 = pneg %p123
        $region58: #{tpu_custom_call.1} parent=47 // pred_check_branch
          %421 = sbr.rel (%p419) target = $region60
        $region59: #{tpu_custom_call.1} parent=47 // pred_region
          %422 = dma.done %s415, 512
        $region60: #{tpu_custom_call.1} parent=47 // pred_fallthru
          _
        %s423 = sand.u32 %s31, 1
        %s424 = scalar_lea.sflag [#allocation10], %s423
        %s425 = sand.u32 %s136, 1
        %s426 = scalar_lea.vmem [#allocation9], %s425
        // Predicated region
        $region61: #{tpu_custom_call.1} parent=47 // pred_check
          %p427 = pneg %p149
        $region62: #{tpu_custom_call.1} parent=47 // pred_check_branch
          %429 = sbr.rel (%p427) target = $region64
        $region63: #{tpu_custom_call.1} parent=47 // pred_region
          %430 = dma.done %s424, 16
        $region64: #{tpu_custom_call.1} parent=47 // pred_fallthru
          _
        %s431 = sand.u32 %s31, 1
        %s432 = scalar_lea.sflag [#allocation10], %s431
        %s433 = sand.u32 %s162, 1
        %s434 = scalar_lea.vmem [#allocation11], %s433
        // Predicated region
        $region65: #{tpu_custom_call.1} parent=47 // pred_check
          %p435 = pneg %p175
        $region66: #{tpu_custom_call.1} parent=47 // pred_check_branch
          %437 = sbr.rel (%p435) target = $region68
        $region67: #{tpu_custom_call.1} parent=47 // pred_region
          %438 = dma.done %s432, 16
        $region68: #{tpu_custom_call.1} parent=47 // pred_fallthru
          _
        // Predicated region
        $region69: #{tpu_custom_call.1} parent=47 // pred_check
          %p439 = pneg %p196
        $region70: #{tpu_custom_call.1} parent=47 // pred_check_branch
          %441 = sbr.rel (%p439) target = $region72
        $region71: #{tpu_custom_call.1} parent=47 // pred_region
          %442 = dma.done [#allocation13], 2048
        $region72: #{tpu_custom_call.1} parent=47 // pred_fallthru
          _
        // Predicated region
        $region73: #{tpu_custom_call.1} parent=47 // pred_check
          %p443 = pneg %p217
        $region74: #{tpu_custom_call.1} parent=47 // pred_check_branch
          %445 = sbr.rel (%p443) target = $region76
        $region75: #{tpu_custom_call.1} parent=47 // pred_region
          %446 = dma.done [#allocation13], 2048
        $region76: #{tpu_custom_call.1} parent=47 // pred_fallthru
          _
        %s447 = sand.u32 %s58, 1
        %s448 = scalar_lea.sflag [#allocation4], %s447
        %s449 = sand.u32 %s58, 1
        %s450 = smul.addr %s449, 128
        %s451 = scalar_lea.vmem [#allocation3], %s450
        %p452 = pneg %p71
        %p453 = pneg %p68
        %s454 = sand.u32 %s31, 1
        %s455 = scalar_lea.sflag [#allocation7], %s454
        %s456 = sand.u32 %s84, 1
        %s457 = smul.addr %s456, 32
        %s458 = scalar_lea.vmem [#allocation6], %s457
        %p459 = pneg %p97
        %p460 = pneg %p94
        %s461 = sand.u32 %s31, 1
        %s462 = scalar_lea.sflag [#allocation7], %s461
        %s463 = sand.u32 %s110, 1
        %s464 = smul.addr %s463, 32
        %s465 = scalar_lea.vmem [#allocation8], %s464
        %p466 = pneg %p123
        %p467 = pneg %p120
        %s468 = sand.u32 %s31, 1
        %s469 = scalar_lea.sflag [#allocation10], %s468
        %s470 = sand.u32 %s136, 1
        %s471 = scalar_lea.vmem [#allocation9], %s470
        %p472 = pneg %p149
        %p473 = pneg %p146
        %s474 = sand.u32 %s31, 1
        %s475 = scalar_lea.sflag [#allocation10], %s474
        %s476 = sand.u32 %s162, 1
        %s477 = scalar_lea.vmem [#allocation11], %s476
        %p478 = pneg %p175
        %p479 = pneg %p172
        %p480 = pneg %p196
        %p481 = pneg %p193
        %p482 = pneg %p217
        %p483 = pneg %p214
        %p484 = pneg %p247
        %p485 = pneg %p244
        %s486 = sand.u32 %s234, 1
        %s487 = scalar_lea.sflag [#allocation5], %s486
        %s488 = sand.u32 %s234, 1
        %s489 = smul.addr %s488, 128
        %s490 = scalar_lea.vmem [#allocation15], %s489
        %s491 = smul.u32 16, %s38
        %s492 = ssub.s32 1, %s491
        %s493 = smul.u32 128, %s492
        %p494 = scmp.eq.s32.totalorder %s38, 0
        // Predicated region
        $region77: #{tpu_custom_call.1} parent=47 // pred_check
          %p495 = pneg %p494
        $region78: #{tpu_custom_call.1} parent=47 // pred_check_branch
          %497 = sbr.rel (%p495) target = $region80
        $region79: #{tpu_custom_call.1} parent=47 // pred_region
          %v498 = vld [vmem:[%s400] sm:$0xff]
          %v499 = vld [vmem:[%s400 + $0x8] sm:$0xff]
          %v500 = vld [vmem:[%s400 + $0x10] sm:$0xff]
          %v501 = vld [vmem:[%s400 + $0x18] sm:$0xff]
          %v502 = vld [vmem:[%s400 + $0x20] sm:$0xff]
          %v503 = vld [vmem:[%s400 + $0x28] sm:$0xff]
          %v504 = vld [vmem:[%s400 + $0x30] sm:$0xff]
          %v505 = vld [vmem:[%s400 + $0x38] sm:$0xff]
          %v506 = vld [vmem:[%s400 + $0x40] sm:$0xff]
          %v507 = vld [vmem:[%s400 + $0x48] sm:$0xff]
          %v508 = vld [vmem:[%s400 + $0x50] sm:$0xff]
          %v509 = vld [vmem:[%s400 + $0x58] sm:$0xff]
          %v510 = vld [vmem:[%s400 + $0x60] sm:$0xff]
          %v511 = vld [vmem:[%s400 + $0x68] sm:$0xff]
          %v512 = vld [vmem:[%s400 + $0x70] sm:$0xff]
          %v513 = vld [vmem:[%s400 + $0x78] sm:$0xff]
          %v514 = vld [vmem:[%s418] sm:$0xff]
          %v515 = vld [vmem:[%s418 + $0x8] sm:$0xff]
          %v516 = vld [vmem:[%s418 + $0x10] sm:$0xff]
          %v517 = vld [vmem:[%s418 + $0x18] sm:$0xff]
          %v518 = vld [vmem:[%s434] sm:$0x1]
          %v520 = vlaneseq
          %v521 = vshrl.u32 %v520, 7
          %v522 = vsub.s32 0, %v521
          %v523 = vrot.slane %v518, %v522
          %vm525 = vcmask 261120
          %v527 = vsel %vm525, %v498, 0
          %v530 = vsel %vm525, %v499, 0
          %v533 = vsel %vm525, %v500, 0
          %v536 = vsel %vm525, %v501, 0
          %v539 = vsel %vm525, %v502, 0
          %v542 = vsel %vm525, %v503, 0
          %v545 = vsel %vm525, %v504, 0
          %v548 = vsel %vm525, %v505, 0
          %v551 = vsel %vm525, %v506, 0
          %v554 = vsel %vm525, %v507, 0
          %v557 = vsel %vm525, %v508, 0
          %v560 = vsel %vm525, %v509, 0
          %v563 = vsel %vm525, %v510, 0
          %v566 = vsel %vm525, %v511, 0
          %v569 = vsel %vm525, %v512, 0
          %v572 = vsel %vm525, %v513, 0
          %574 = vmatprep.subr.mxu0 0.0
          %575 = vmatpush1.msra.mxu0 %v514
          %576 = vmatprep.subr.mxu0 0.0
          %577 = vmatpush1.msra.mxu0 %v515
          %578 = vmatprep.subr.mxu0 0.0
          %579 = vmatpush1.msra.mxu0 %v516
          %580 = vmatprep.subr.mxu0 0.0
          %581 = vmatpush1.msra.mxu0 %v517
          %582 = vmatprep.subr.mxu0 0.0
          %583 = vmatpush1.msra.mxu0 0.0
          %584 = vmatprep.subr.mxu0 0.0
          %585 = vmatpush1.msra.mxu0 0.0
          %586 = vmatprep.subr.mxu0 0.0
          %587 = vmatpush1.msra.mxu0 0.0
          %588 = vmatprep.subr.mxu0 0.0
          %589 = vmatpush1.msra.mxu0 0.0
          %590 = vmatprep.subr.mxu0 0.0
          %591 = vmatpush1.msra.mxu0 0.0
          %592 = vmatprep.subr.mxu0 0.0
          %593 = vmatpush1.msra.mxu0 0.0
          %594 = vmatprep.subr.mxu0 0.0
          %595 = vmatpush1.msra.mxu0 0.0
          %596 = vmatprep.subr.mxu0 0.0
          %597 = vmatpush1.msra.mxu0 0.0
          %598 = vmatprep.subr.mxu0 0.0
          %599 = vmatpush1.msra.mxu0 0.0
          %600 = vmatprep.subr.mxu0 0.0
          %601 = vmatpush1.msra.mxu0 0.0
          %602 = vmatprep.subr.mxu0 0.0
          %603 = vmatpush1.msra.mxu0 0.0
          %604 = vmatprep.subr.mxu0 0.0
          %605 = vmatpush1.msra.mxu0 0.0
          %606 = vmatprep.subr.mxu0 0.0
          %607 = vmatpush1.msra.mxu0 0.0
          %608 = vmatprep.subr.mxu0 0.0
          %609 = vmatpush1.msra.mxu0 0.0
          %610 = vmatprep.subr.mxu0 0.0
          %611 = vmatpush1.msra.mxu0 0.0
          %612 = vmatprep.subr.mxu0 0.0
          %613 = vmatpush1.msra.mxu0 0.0
          %614 = vmatprep.subr.mxu0 0.0
          %615 = vmatpush1.msra.mxu0 0.0
          %616 = vmatprep.subr.mxu0 0.0
          %617 = vmatpush1.msra.mxu0 0.0
          %618 = vmatprep.subr.mxu0 0.0
          %619 = vmatpush1.msra.mxu0 0.0
          %620 = vmatprep.subr.mxu0 0.0
          %621 = vmatpush1.msra.mxu0 0.0
          %622 = vmatprep.subr.mxu0 0.0
          %623 = vmatpush1.msra.mxu0 0.0
          %624 = vmatprep.subr.mxu0 0.0
          %625 = vmatpush1.msra.mxu0 0.0
          %626 = vmatprep.subr.mxu0 0.0
          %627 = vmatpush1.msra.mxu0 0.0
          %628 = vmatprep.subr.mxu0 0.0
          %629 = vmatpush1.msra.mxu0 0.0
          %630 = vmatprep.subr.mxu0 0.0
          %631 = vmatpush1.msra.mxu0 0.0
          %632 = vmatprep.subr.mxu0 0.0
          %633 = vmatpush1.msra.mxu0 0.0
          %634 = vmatprep.subr.mxu0 0.0
          %635 = vmatpush1.msra.mxu0 0.0
          %636 = vmatprep.subr.mxu0 0.0
          %637 = vmatpush1.msra.mxu0 0.0
          %638 = vmatprep.mubr.f32.mxu0 0.0
          %639 = vmatmul.mubr.f32.gmra.mrb[0].mxu0 %v527
          %v640 = vpop.f32.mrb[0].mxu0
          %v641 = vadd.f32 %v523, %v640
          %v642 = vpop.f32.mrb[0].mxu0
          %643 = vmatprep.mubr.f32.mxu0 0.0
          %644 = vmatmul.mubr.f32.gmra.mrb[0].mxu0 %v530
          %v645 = vpop.f32.mrb[0].mxu0
          %v646 = vadd.f32 %v523, %v645
          %v647 = vpop.f32.mrb[0].mxu0
          %648 = vmatprep.mubr.f32.mxu0 0.0
          %649 = vmatmul.mubr.f32.gmra.mrb[0].mxu0 %v533
          %v650 = vpop.f32.mrb[0].mxu0
          %v651 = vadd.f32 %v523, %v650
          %v652 = vpop.f32.mrb[0].mxu0
          %653 = vmatprep.mubr.f32.mxu0 0.0
          %654 = vmatmul.mubr.f32.gmra.mrb[0].mxu0 %v536
          %v655 = vpop.f32.mrb[0].mxu0
          %v656 = vadd.f32 %v523, %v655
          %v657 = vpop.f32.mrb[0].mxu0
          %658 = vmatprep.mubr.f32.mxu0 0.0
          %659 = vmatmul.mubr.f32.gmra.mrb[0].mxu0 %v539
          %v660 = vpop.f32.mrb[0].mxu0
          %v661 = vadd.f32 %v523, %v660
          %v662 = vpop.f32.mrb[0].mxu0
          %663 = vmatprep.mubr.f32.mxu0 0.0
          %664 = vmatmul.mubr.f32.gmra.mrb[0].mxu0 %v542
          %v665 = vpop.f32.mrb[0].mxu0
          %v666 = vadd.f32 %v523, %v665
          %v667 = vpop.f32.mrb[0].mxu0
          %668 = vmatprep.mubr.f32.mxu0 0.0
          %669 = vmatmul.mubr.f32.gmra.mrb[0].mxu0 %v545
          %v670 = vpop.f32.mrb[0].mxu0
          %v671 = vadd.f32 %v523, %v670
          %v672 = vpop.f32.mrb[0].mxu0
          %673 = vmatprep.mubr.f32.mxu0 0.0
          %674 = vmatmul.mubr.f32.gmra.mrb[0].mxu0 %v548
          %v675 = vpop.f32.mrb[0].mxu0
          %v676 = vadd.f32 %v523, %v675
          %v677 = vpop.f32.mrb[0].mxu0
          %678 = vmatprep.mubr.f32.mxu0 0.0
          %679 = vmatmul.mubr.f32.gmra.mrb[0].mxu0 %v551
          %v680 = vpop.f32.mrb[0].mxu0
          %v681 = vadd.f32 %v523, %v680
          %v682 = vpop.f32.mrb[0].mxu0
          %683 = vmatprep.mubr.f32.mxu0 0.0
          %684 = vmatmul.mubr.f32.gmra.mrb[0].mxu0 %v554
          %v685 = vpop.f32.mrb[0].mxu0
          %v686 = vadd.f32 %v523, %v685
          %v687 = vpop.f32.mrb[0].mxu0
          %688 = vmatprep.mubr.f32.mxu0 0.0
          %689 = vmatmul.mubr.f32.gmra.mrb[0].mxu0 %v557
          %v690 = vpop.f32.mrb[0].mxu0
          %v691 = vadd.f32 %v523, %v690
          %v692 = vpop.f32.mrb[0].mxu0
          %693 = vmatprep.mubr.f32.mxu0 0.0
          %694 = vmatmul.mubr.f32.gmra.mrb[0].mxu0 %v560
          %v695 = vpop.f32.mrb[0].mxu0
          %v696 = vadd.f32 %v523, %v695
          %v697 = vpop.f32.mrb[0].mxu0
          %698 = vmatprep.mubr.f32.mxu0 0.0
          %699 = vmatmul.mubr.f32.gmra.mrb[0].mxu0 %v563
          %v700 = vpop.f32.mrb[0].mxu0
          %v701 = vadd.f32 %v523, %v700
          %v702 = vpop.f32.mrb[0].mxu0
          %703 = vmatprep.mubr.f32.mxu0 0.0
          %704 = vmatmul.mubr.f32.gmra.mrb[0].mxu0 %v566
          %v705 = vpop.f32.mrb[0].mxu0
          %v706 = vadd.f32 %v523, %v705
          %v707 = vpop.f32.mrb[0].mxu0
          %708 = vmatprep.mubr.f32.mxu0 0.0
          %709 = vmatmul.mubr.f32.gmra.mrb[0].mxu0 %v569
          %v710 = vpop.f32.mrb[0].mxu0
          %v711 = vadd.f32 %v523, %v710
          %v712 = vpop.f32.mrb[0].mxu0
          %713 = vmatprep.mubr.f32.mxu0 0.0
          %714 = vmatmul.mubr.f32.gmra.mrb[0].mxu0 %v572
          %v715 = vpop.f32.mrb[0].mxu0
          %v716 = vadd.f32 %v523, %v715
          %v717 = vpop.f32.mrb[0].mxu0
          %718 = vdwg.mxu0
          %v719 = vld [vmem:[#allocation12] sm:$0xff]
          %v720 = vld [vmem:[#allocation12 + $0x8] sm:$0xff]
          %v721 = vld [vmem:[#allocation12 + $0x10] sm:$0xff]
          %v722 = vld [vmem:[#allocation12 + $0x18] sm:$0xff]
          %v723 = vld [vmem:[#allocation12 + $0x20] sm:$0xff]
          %v724 = vld [vmem:[#allocation12 + $0x28] sm:$0xff]
          %v725 = vld [vmem:[#allocation12 + $0x30] sm:$0xff]
          %v726 = vld [vmem:[#allocation12 + $0x38] sm:$0xff]
          %v727 = vld [vmem:[#allocation12 + $0x40] sm:$0xff]
          %v728 = vld [vmem:[#allocation12 + $0x48] sm:$0xff]
          %v729 = vld [vmem:[#allocation12 + $0x50] sm:$0xff]
          %v730 = vld [vmem:[#allocation12 + $0x58] sm:$0xff]
          %v731 = vld [vmem:[#allocation12 + $0x60] sm:$0xff]
          %v732 = vld [vmem:[#allocation12 + $0x68] sm:$0xff]
          %v733 = vld [vmem:[#allocation12 + $0x70] sm:$0xff]
          %v734 = vld [vmem:[#allocation12 + $0x78] sm:$0xff]
          %v735 = vmul.f32 %v641, %v719
          %v736 = vmul.f32 %v646, %v720
          %v737 = vmul.f32 %v651, %v721
          %v738 = vmul.f32 %v656, %v722
          %v739 = vmul.f32 %v661, %v723
          %v740 = vmul.f32 %v666, %v724
          %v741 = vmul.f32 %v671, %v725
          %v742 = vmul.f32 %v676, %v726
          %v743 = vmul.f32 %v681, %v727
          %v744 = vmul.f32 %v686, %v728
          %v745 = vmul.f32 %v691, %v729
          %v746 = vmul.f32 %v696, %v730
          %v747 = vmul.f32 %v701, %v731
          %v748 = vmul.f32 %v706, %v732
          %v749 = vmul.f32 %v711, %v733
          %v750 = vmul.f32 %v716, %v734
          %767 = vrot.lane.b32.xlu0 %v641, 120
          %v768 = vpop.permute.xlu0 %767
          %769 = vrot.lane.b32.xlu0 %v646, 120
          %v770 = vpop.permute.xlu0 %769
          %771 = vrot.lane.b32.xlu0 %v651, 120
          %v772 = vpop.permute.xlu0 %771
          %773 = vrot.lane.b32.xlu0 %v656, 120
          %v774 = vpop.permute.xlu0 %773
          %775 = vrot.lane.b32.xlu0 %v661, 120
          %v776 = vpop.permute.xlu0 %775
          %777 = vrot.lane.b32.xlu0 %v666, 120
          %v778 = vpop.permute.xlu0 %777
          %779 = vrot.lane.b32.xlu0 %v671, 120
          %v780 = vpop.permute.xlu0 %779
          %781 = vrot.lane.b32.xlu0 %v676, 120
          %v782 = vpop.permute.xlu0 %781
          %783 = vrot.lane.b32.xlu0 %v681, 120
          %v784 = vpop.permute.xlu0 %783
          %785 = vrot.lane.b32.xlu0 %v686, 120
          %v786 = vpop.permute.xlu0 %785
          %787 = vrot.lane.b32.xlu0 %v691, 120
          %v788 = vpop.permute.xlu0 %787
          %789 = vrot.lane.b32.xlu0 %v696, 120
          %v790 = vpop.permute.xlu0 %789
          %791 = vrot.lane.b32.xlu0 %v701, 120
          %v792 = vpop.permute.xlu0 %791
          %793 = vrot.lane.b32.xlu0 %v706, 120
          %v794 = vpop.permute.xlu0 %793
          %795 = vrot.lane.b32.xlu0 %v711, 120
          %v796 = vpop.permute.xlu0 %795
          %797 = vrot.lane.b32.xlu0 %v716, 120
          %v798 = vpop.permute.xlu0 %797
          %815 = vrot.lane.b32.xlu0 %v641, 8
          %v816 = vpop.permute.xlu0 %815
          %817 = vrot.lane.b32.xlu0 %v646, 8
          %v818 = vpop.permute.xlu0 %817
          %819 = vrot.lane.b32.xlu0 %v651, 8
          %v820 = vpop.permute.xlu0 %819
          %821 = vrot.lane.b32.xlu0 %v656, 8
          %v822 = vpop.permute.xlu0 %821
          %823 = vrot.lane.b32.xlu0 %v661, 8
          %v824 = vpop.permute.xlu0 %823
          %825 = vrot.lane.b32.xlu0 %v666, 8
          %v826 = vpop.permute.xlu0 %825
          %827 = vrot.lane.b32.xlu0 %v671, 8
          %v828 = vpop.permute.xlu0 %827
          %829 = vrot.lane.b32.xlu0 %v676, 8
          %v830 = vpop.permute.xlu0 %829
          %831 = vrot.lane.b32.xlu0 %v681, 8
          %v832 = vpop.permute.xlu0 %831
          %833 = vrot.lane.b32.xlu0 %v686, 8
          %v834 = vpop.permute.xlu0 %833
          %835 = vrot.lane.b32.xlu0 %v691, 8
          %v836 = vpop.permute.xlu0 %835
          %837 = vrot.lane.b32.xlu0 %v696, 8
          %v838 = vpop.permute.xlu0 %837
          %839 = vrot.lane.b32.xlu0 %v701, 8
          %v840 = vpop.permute.xlu0 %839
          %841 = vrot.lane.b32.xlu0 %v706, 8
          %v842 = vpop.permute.xlu0 %841
          %843 = vrot.lane.b32.xlu0 %v711, 8
          %v844 = vpop.permute.xlu0 %843
          %845 = vrot.lane.b32.xlu0 %v716, 8
          %v846 = vpop.permute.xlu0 %845
          %vm863 = vcmask 64512
          %v864 = vsel %vm863, %v768, %v816
          %v865 = vsel %vm863, %v770, %v818
          %v866 = vsel %vm863, %v772, %v820
          %v867 = vsel %vm863, %v774, %v822
          %v868 = vsel %vm863, %v776, %v824
          %v869 = vsel %vm863, %v778, %v826
          %v870 = vsel %vm863, %v780, %v828
          %v871 = vsel %vm863, %v782, %v830
          %v872 = vsel %vm863, %v784, %v832
          %v873 = vsel %vm863, %v786, %v834
          %v874 = vsel %vm863, %v788, %v836
          %v875 = vsel %vm863, %v790, %v838
          %v876 = vsel %vm863, %v792, %v840
          %v877 = vsel %vm863, %v794, %v842
          %v878 = vsel %vm863, %v796, %v844
          %v879 = vsel %vm863, %v798, %v846
          %v880 = vld [vmem:[#allocation14] sm:$0xff]
          %v881 = vld [vmem:[#allocation14 + $0x8] sm:$0xff]
          %v882 = vld [vmem:[#allocation14 + $0x10] sm:$0xff]
          %v883 = vld [vmem:[#allocation14 + $0x18] sm:$0xff]
          %v884 = vld [vmem:[#allocation14 + $0x20] sm:$0xff]
          %v885 = vld [vmem:[#allocation14 + $0x28] sm:$0xff]
          %v886 = vld [vmem:[#allocation14 + $0x30] sm:$0xff]
          %v887 = vld [vmem:[#allocation14 + $0x38] sm:$0xff]
          %v888 = vld [vmem:[#allocation14 + $0x40] sm:$0xff]
          %v889 = vld [vmem:[#allocation14 + $0x48] sm:$0xff]
          %v890 = vld [vmem:[#allocation14 + $0x50] sm:$0xff]
          %v891 = vld [vmem:[#allocation14 + $0x58] sm:$0xff]
          %v892 = vld [vmem:[#allocation14 + $0x60] sm:$0xff]
          %v893 = vld [vmem:[#allocation14 + $0x68] sm:$0xff]
          %v894 = vld [vmem:[#allocation14 + $0x70] sm:$0xff]
          %v895 = vld [vmem:[#allocation14 + $0x78] sm:$0xff]
          %v896 = vmul.f32 %v864, %v880
          %v897 = vmul.f32 %v865, %v881
          %v898 = vmul.f32 %v866, %v882
          %v899 = vmul.f32 %v867, %v883
          %v900 = vmul.f32 %v868, %v884
          %v901 = vmul.f32 %v869, %v885
          %v902 = vmul.f32 %v870, %v886
          %v903 = vmul.f32 %v871, %v887
          %v904 = vmul.f32 %v872, %v888
          %v905 = vmul.f32 %v873, %v889
          %v906 = vmul.f32 %v874, %v890
          %v907 = vmul.f32 %v875, %v891
          %v908 = vmul.f32 %v876, %v892
          %v909 = vmul.f32 %v877, %v893
          %v910 = vmul.f32 %v878, %v894
          %v911 = vmul.f32 %v879, %v895
          %v912 = vadd.f32 %v735, %v896
          %v913 = vadd.f32 %v736, %v897
          %v914 = vadd.f32 %v737, %v898
          %v915 = vadd.f32 %v738, %v899
          %v916 = vadd.f32 %v739, %v900
          %v917 = vadd.f32 %v740, %v901
          %v918 = vadd.f32 %v741, %v902
          %v919 = vadd.f32 %v742, %v903
          %v920 = vadd.f32 %v743, %v904
          %v921 = vadd.f32 %v744, %v905
          %v922 = vadd.f32 %v745, %v906
          %v923 = vadd.f32 %v746, %v907
          %v924 = vadd.f32 %v747, %v908
          %v925 = vadd.f32 %v748, %v909
          %v926 = vadd.f32 %v749, %v910
          %v927 = vadd.f32 %v750, %v911
          %vm928 = vcmask 130048
          %929 = vst.msk [vmem:[#allocation2] sm:$0xff] %vm928, %v912
          %930 = vst.msk [vmem:[#allocation2 + $0x8] sm:$0xff] %vm928, %v913
          %931 = vst.msk [vmem:[#allocation2 + $0x10] sm:$0xff] %vm928, %v914
          %932 = vst.msk [vmem:[#allocation2 + $0x18] sm:$0xff] %vm928, %v915
          %933 = vst.msk [vmem:[#allocation2 + $0x20] sm:$0xff] %vm928, %v916
          %934 = vst.msk [vmem:[#allocation2 + $0x28] sm:$0xff] %vm928, %v917
          %935 = vst.msk [vmem:[#allocation2 + $0x30] sm:$0xff] %vm928, %v918
          %936 = vst.msk [vmem:[#allocation2 + $0x38] sm:$0xff] %vm928, %v919
          %937 = vst.msk [vmem:[#allocation2 + $0x40] sm:$0xff] %vm928, %v920
          %938 = vst.msk [vmem:[#allocation2 + $0x48] sm:$0xff] %vm928, %v921
          %939 = vst.msk [vmem:[#allocation2 + $0x50] sm:$0xff] %vm928, %v922
          %940 = vst.msk [vmem:[#allocation2 + $0x58] sm:$0xff] %vm928, %v923
          %941 = vst.msk [vmem:[#allocation2 + $0x60] sm:$0xff] %vm928, %v924
          %942 = vst.msk [vmem:[#allocation2 + $0x68] sm:$0xff] %vm928, %v925
          %943 = vst.msk [vmem:[#allocation2 + $0x70] sm:$0xff] %vm928, %v926
          %944 = vst.msk [vmem:[#allocation2 + $0x78] sm:$0xff] %vm928, %v927
        $region80: #{tpu_custom_call.1} parent=47 // pred_fallthru
          _
        %s945 = smul.u32 %s38, 128
        %s946 = scalar_lea.vmem %s400, %s945 [#allocation3]
        %v947 = vld [vmem:[%s946] sm:$0xff]
        %v948 = vld [vmem:[%s946 + $0x8] sm:$0xff]
        %v949 = vld [vmem:[%s946 + $0x10] sm:$0xff]
        %v950 = vld [vmem:[%s946 + $0x18] sm:$0xff]
        %v951 = vld [vmem:[%s946 + $0x20] sm:$0xff]
        %v952 = vld [vmem:[%s946 + $0x28] sm:$0xff]
        %v953 = vld [vmem:[%s946 + $0x30] sm:$0xff]
        %v954 = vld [vmem:[%s946 + $0x38] sm:$0xff]
        %v955 = vld [vmem:[%s946 + $0x40] sm:$0xff]
        %v956 = vld [vmem:[%s946 + $0x48] sm:$0xff]
        %v957 = vld [vmem:[%s946 + $0x50] sm:$0xff]
        %v958 = vld [vmem:[%s946 + $0x58] sm:$0xff]
        %v959 = vld [vmem:[%s946 + $0x60] sm:$0xff]
        %v960 = vld [vmem:[%s946 + $0x68] sm:$0xff]
        %v961 = vld [vmem:[%s946 + $0x70] sm:$0xff]
        %v962 = vld [vmem:[%s946 + $0x78] sm:$0xff]
        %v963 = vld [vmem:[%s409] sm:$0xff]
        %v964 = vld [vmem:[%s409 + $0x8] sm:$0xff]
        %v965 = vld [vmem:[%s409 + $0x10] sm:$0xff]
        %v966 = vld [vmem:[%s409 + $0x18] sm:$0xff]
        %v967 = vld [vmem:[%s426] sm:$0x1]
        %v969 = vlaneseq
        %v970 = vshrl.u32 %v969, 7
        %v971 = vsub.s32 0, %v970
        %v972 = vrot.slane %v967, %v971
        %vm974 = vcmask 261120
        %v976 = vsel %vm974, %v947, 0
        %v979 = vsel %vm974, %v948, 0
        %v982 = vsel %vm974, %v949, 0
        %v985 = vsel %vm974, %v950, 0
        %v988 = vsel %vm974, %v951, 0
        %v991 = vsel %vm974, %v952, 0
        %v994 = vsel %vm974, %v953, 0
        %v997 = vsel %vm974, %v954, 0
        %v1000 = vsel %vm974, %v955, 0
        %v1003 = vsel %vm974, %v956, 0
        %v1006 = vsel %vm974, %v957, 0
        %v1009 = vsel %vm974, %v958, 0
        %v1012 = vsel %vm974, %v959, 0
        %v1015 = vsel %vm974, %v960, 0
        %v1018 = vsel %vm974, %v961, 0
        %v1021 = vsel %vm974, %v962, 0
        %1023 = vmatprep.subr.mxu0 0.0
        %1024 = vmatpush1.msra.mxu0 %v963
        %1025 = vmatprep.subr.mxu0 0.0
        %1026 = vmatpush1.msra.mxu0 %v964
        %1027 = vmatprep.subr.mxu0 0.0
        %1028 = vmatpush1.msra.mxu0 %v965
        %1029 = vmatprep.subr.mxu0 0.0
        %1030 = vmatpush1.msra.mxu0 %v966
        %1031 = vmatprep.subr.mxu0 0.0
        %1032 = vmatpush1.msra.mxu0 0.0
        %1033 = vmatprep.subr.mxu0 0.0
        %1034 = vmatpush1.msra.mxu0 0.0
        %1035 = vmatprep.subr.mxu0 0.0
        %1036 = vmatpush1.msra.mxu0 0.0
        %1037 = vmatprep.subr.mxu0 0.0
        %1038 = vmatpush1.msra.mxu0 0.0
        %1039 = vmatprep.subr.mxu0 0.0
        %1040 = vmatpush1.msra.mxu0 0.0
        %1041 = vmatprep.subr.mxu0 0.0
        %1042 = vmatpush1.msra.mxu0 0.0
        %1043 = vmatprep.subr.mxu0 0.0
        %1044 = vmatpush1.msra.mxu0 0.0
        %1045 = vmatprep.subr.mxu0 0.0
        %1046 = vmatpush1.msra.mxu0 0.0
        %1047 = vmatprep.subr.mxu0 0.0
        %1048 = vmatpush1.msra.mxu0 0.0
        %1049 = vmatprep.subr.mxu0 0.0
        %1050 = vmatpush1.msra.mxu0 0.0
        %1051 = vmatprep.subr.mxu0 0.0
        %1052 = vmatpush1.msra.mxu0 0.0
        %1053 = vmatprep.subr.mxu0 0.0
        %1054 = vmatpush1.msra.mxu0 0.0
        %1055 = vmatprep.subr.mxu0 0.0
        %1056 = vmatpush1.msra.mxu0 0.0
        %1057 = vmatprep.subr.mxu0 0.0
        %1058 = vmatpush1.msra.mxu0 0.0
        %1059 = vmatprep.subr.mxu0 0.0
        %1060 = vmatpush1.msra.mxu0 0.0
        %1061 = vmatprep.subr.mxu0 0.0
        %1062 = vmatpush1.msra.mxu0 0.0
        %1063 = vmatprep.subr.mxu0 0.0
        %1064 = vmatpush1.msra.mxu0 0.0
        %1065 = vmatprep.subr.mxu0 0.0
        %1066 = vmatpush1.msra.mxu0 0.0
        %1067 = vmatprep.subr.mxu0 0.0
        %1068 = vmatpush1.msra.mxu0 0.0
        %1069 = vmatprep.subr.mxu0 0.0
        %1070 = vmatpush1.msra.mxu0 0.0
        %1071 = vmatprep.subr.mxu0 0.0
        %1072 = vmatpush1.msra.mxu0 0.0
        %1073 = vmatprep.subr.mxu0 0.0
        %1074 = vmatpush1.msra.mxu0 0.0
        %1075 = vmatprep.subr.mxu0 0.0
        %1076 = vmatpush1.msra.mxu0 0.0
        %1077 = vmatprep.subr.mxu0 0.0
        %1078 = vmatpush1.msra.mxu0 0.0
        %1079 = vmatprep.subr.mxu0 0.0
        %1080 = vmatpush1.msra.mxu0 0.0
        %1081 = vmatprep.subr.mxu0 0.0
        %1082 = vmatpush1.msra.mxu0 0.0
        %1083 = vmatprep.subr.mxu0 0.0
        %1084 = vmatpush1.msra.mxu0 0.0
        %1085 = vmatprep.subr.mxu0 0.0
        %1086 = vmatpush1.msra.mxu0 0.0
        %1087 = vmatprep.mubr.f32.mxu0 0.0
        %1088 = vmatmul.mubr.f32.gmra.mrb[0].mxu0 %v976
        %v1089 = vpop.f32.mrb[0].mxu0
        %v1090 = vadd.f32 %v972, %v1089
        %v1091 = vpop.f32.mrb[0].mxu0
        %1092 = vmatprep.mubr.f32.mxu0 0.0
        %1093 = vmatmul.mubr.f32.gmra.mrb[0].mxu0 %v979
        %v1094 = vpop.f32.mrb[0].mxu0
        %v1095 = vadd.f32 %v972, %v1094
        %v1096 = vpop.f32.mrb[0].mxu0
        %1097 = vmatprep.mubr.f32.mxu0 0.0
        %1098 = vmatmul.mubr.f32.gmra.mrb[0].mxu0 %v982
        %v1099 = vpop.f32.mrb[0].mxu0
        %v1100 = vadd.f32 %v972, %v1099
        %v1101 = vpop.f32.mrb[0].mxu0
        %1102 = vmatprep.mubr.f32.mxu0 0.0
        %1103 = vmatmul.mubr.f32.gmra.mrb[0].mxu0 %v985
        %v1104 = vpop.f32.mrb[0].mxu0
        %v1105 = vadd.f32 %v972, %v1104
        %v1106 = vpop.f32.mrb[0].mxu0
        %1107 = vmatprep.mubr.f32.mxu0 0.0
        %1108 = vmatmul.mubr.f32.gmra.mrb[0].mxu0 %v988
        %v1109 = vpop.f32.mrb[0].mxu0
        %v1110 = vadd.f32 %v972, %v1109
        %v1111 = vpop.f32.mrb[0].mxu0
        %1112 = vmatprep.mubr.f32.mxu0 0.0
        %1113 = vmatmul.mubr.f32.gmra.mrb[0].mxu0 %v991
        %v1114 = vpop.f32.mrb[0].mxu0
        %v1115 = vadd.f32 %v972, %v1114
        %v1116 = vpop.f32.mrb[0].mxu0
        %1117 = vmatprep.mubr.f32.mxu0 0.0
        %1118 = vmatmul.mubr.f32.gmra.mrb[0].mxu0 %v994
        %v1119 = vpop.f32.mrb[0].mxu0
        %v1120 = vadd.f32 %v972, %v1119
        %v1121 = vpop.f32.mrb[0].mxu0
        %1122 = vmatprep.mubr.f32.mxu0 0.0
        %1123 = vmatmul.mubr.f32.gmra.mrb[0].mxu0 %v997
        %v1124 = vpop.f32.mrb[0].mxu0
        %v1125 = vadd.f32 %v972, %v1124
        %v1126 = vpop.f32.mrb[0].mxu0
        %1127 = vmatprep.mubr.f32.mxu0 0.0
        %1128 = vmatmul.mubr.f32.gmra.mrb[0].mxu0 %v1000
        %v1129 = vpop.f32.mrb[0].mxu0
        %v1130 = vadd.f32 %v972, %v1129
        %v1131 = vpop.f32.mrb[0].mxu0
        %1132 = vmatprep.mubr.f32.mxu0 0.0
        %1133 = vmatmul.mubr.f32.gmra.mrb[0].mxu0 %v1003
        %v1134 = vpop.f32.mrb[0].mxu0
        %v1135 = vadd.f32 %v972, %v1134
        %v1136 = vpop.f32.mrb[0].mxu0
        %1137 = vmatprep.mubr.f32.mxu0 0.0
        %1138 = vmatmul.mubr.f32.gmra.mrb[0].mxu0 %v1006
        %v1139 = vpop.f32.mrb[0].mxu0
        %v1140 = vadd.f32 %v972, %v1139
        %v1141 = vpop.f32.mrb[0].mxu0
        %1142 = vmatprep.mubr.f32.mxu0 0.0
        %1143 = vmatmul.mubr.f32.gmra.mrb[0].mxu0 %v1009
        %v1144 = vpop.f32.mrb[0].mxu0
        %v1145 = vadd.f32 %v972, %v1144
        %v1146 = vpop.f32.mrb[0].mxu0
        %1147 = vmatprep.mubr.f32.mxu0 0.0
        %1148 = vmatmul.mubr.f32.gmra.mrb[0].mxu0 %v1012
        %v1149 = vpop.f32.mrb[0].mxu0
        %v1150 = vadd.f32 %v972, %v1149
        %v1151 = vpop.f32.mrb[0].mxu0
        %1152 = vmatprep.mubr.f32.mxu0 0.0
        %1153 = vmatmul.mubr.f32.gmra.mrb[0].mxu0 %v1015
        %v1154 = vpop.f32.mrb[0].mxu0
        %v1155 = vadd.f32 %v972, %v1154
        %v1156 = vpop.f32.mrb[0].mxu0
        %1157 = vmatprep.mubr.f32.mxu0 0.0
        %1158 = vmatmul.mubr.f32.gmra.mrb[0].mxu0 %v1018
        %v1159 = vpop.f32.mrb[0].mxu0
        %v1160 = vadd.f32 %v972, %v1159
        %v1161 = vpop.f32.mrb[0].mxu0
        %1162 = vmatprep.mubr.f32.mxu0 0.0
        %1163 = vmatmul.mubr.f32.gmra.mrb[0].mxu0 %v1021
        %v1164 = vpop.f32.mrb[0].mxu0
        %v1165 = vadd.f32 %v972, %v1164
        %v1166 = vpop.f32.mrb[0].mxu0
        %1167 = vdwg.mxu0
        %s1168 = scalar_lea.vmem [#allocation12], %s945
        %v1169 = vld [vmem:[%s1168] sm:$0xff]
        %v1170 = vld [vmem:[%s1168 + $0x8] sm:$0xff]
        %v1171 = vld [vmem:[%s1168 + $0x10] sm:$0xff]
        %v1172 = vld [vmem:[%s1168 + $0x18] sm:$0xff]
        %v1173 = vld [vmem:[%s1168 + $0x20] sm:$0xff]
        %v1174 = vld [vmem:[%s1168 + $0x28] sm:$0xff]
        %v1175 = vld [vmem:[%s1168 + $0x30] sm:$0xff]
        %v1176 = vld [vmem:[%s1168 + $0x38] sm:$0xff]
        %v1177 = vld [vmem:[%s1168 + $0x40] sm:$0xff]
        %v1178 = vld [vmem:[%s1168 + $0x48] sm:$0xff]
        %v1179 = vld [vmem:[%s1168 + $0x50] sm:$0xff]
        %v1180 = vld [vmem:[%s1168 + $0x58] sm:$0xff]
        %v1181 = vld [vmem:[%s1168 + $0x60] sm:$0xff]
        %v1182 = vld [vmem:[%s1168 + $0x68] sm:$0xff]
        %v1183 = vld [vmem:[%s1168 + $0x70] sm:$0xff]
        %v1184 = vld [vmem:[%s1168 + $0x78] sm:$0xff]
        %v1185 = vmul.f32 %v1090, %v1169
        %v1186 = vmul.f32 %v1095, %v1170
        %v1187 = vmul.f32 %v1100, %v1171
        %v1188 = vmul.f32 %v1105, %v1172
        %v1189 = vmul.f32 %v1110, %v1173
        %v1190 = vmul.f32 %v1115, %v1174
        %v1191 = vmul.f32 %v1120, %v1175
        %v1192 = vmul.f32 %v1125, %v1176
        %v1193 = vmul.f32 %v1130, %v1177
        %v1194 = vmul.f32 %v1135, %v1178
        %v1195 = vmul.f32 %v1140, %v1179
        %v1196 = vmul.f32 %v1145, %v1180
        %v1197 = vmul.f32 %v1150, %v1181
        %v1198 = vmul.f32 %v1155, %v1182
        %v1199 = vmul.f32 %v1160, %v1183
        %v1200 = vmul.f32 %v1165, %v1184
        %1217 = vrot.lane.b32.xlu0 %v1090, 120
        %v1218 = vpop.permute.xlu0 %1217
        %1219 = vrot.lane.b32.xlu0 %v1095, 120
        %v1220 = vpop.permute.xlu0 %1219
        %1221 = vrot.lane.b32.xlu0 %v1100, 120
        %v1222 = vpop.permute.xlu0 %1221
        %1223 = vrot.lane.b32.xlu0 %v1105, 120
        %v1224 = vpop.permute.xlu0 %1223
        %1225 = vrot.lane.b32.xlu0 %v1110, 120
        %v1226 = vpop.permute.xlu0 %1225
        %1227 = vrot.lane.b32.xlu0 %v1115, 120
        %v1228 = vpop.permute.xlu0 %1227
        %1229 = vrot.lane.b32.xlu0 %v1120, 120
        %v1230 = vpop.permute.xlu0 %1229
        %1231 = vrot.lane.b32.xlu0 %v1125, 120
        %v1232 = vpop.permute.xlu0 %1231
        %1233 = vrot.lane.b32.xlu0 %v1130, 120
        %v1234 = vpop.permute.xlu0 %1233
        %1235 = vrot.lane.b32.xlu0 %v1135, 120
        %v1236 = vpop.permute.xlu0 %1235
        %1237 = vrot.lane.b32.xlu0 %v1140, 120
        %v1238 = vpop.permute.xlu0 %1237
        %1239 = vrot.lane.b32.xlu0 %v1145, 120
        %v1240 = vpop.permute.xlu0 %1239
        %1241 = vrot.lane.b32.xlu0 %v1150, 120
        %v1242 = vpop.permute.xlu0 %1241
        %1243 = vrot.lane.b32.xlu0 %v1155, 120
        %v1244 = vpop.permute.xlu0 %1243
        %1245 = vrot.lane.b32.xlu0 %v1160, 120
        %v1246 = vpop.permute.xlu0 %1245
        %1247 = vrot.lane.b32.xlu0 %v1165, 120
        %v1248 = vpop.permute.xlu0 %1247
        %1265 = vrot.lane.b32.xlu0 %v1090, 8
        %v1266 = vpop.permute.xlu0 %1265
        %1267 = vrot.lane.b32.xlu0 %v1095, 8
        %v1268 = vpop.permute.xlu0 %1267
        %1269 = vrot.lane.b32.xlu0 %v1100, 8
        %v1270 = vpop.permute.xlu0 %1269
        %1271 = vrot.lane.b32.xlu0 %v1105, 8
        %v1272 = vpop.permute.xlu0 %1271
        %1273 = vrot.lane.b32.xlu0 %v1110, 8
        %v1274 = vpop.permute.xlu0 %1273
        %1275 = vrot.lane.b32.xlu0 %v1115, 8
        %v1276 = vpop.permute.xlu0 %1275
        %1277 = vrot.lane.b32.xlu0 %v1120, 8
        %v1278 = vpop.permute.xlu0 %1277
        %1279 = vrot.lane.b32.xlu0 %v1125, 8
        %v1280 = vpop.permute.xlu0 %1279
        %1281 = vrot.lane.b32.xlu0 %v1130, 8
        %v1282 = vpop.permute.xlu0 %1281
        %1283 = vrot.lane.b32.xlu0 %v1135, 8
        %v1284 = vpop.permute.xlu0 %1283
        %1285 = vrot.lane.b32.xlu0 %v1140, 8
        %v1286 = vpop.permute.xlu0 %1285
        %1287 = vrot.lane.b32.xlu0 %v1145, 8
        %v1288 = vpop.permute.xlu0 %1287
        %1289 = vrot.lane.b32.xlu0 %v1150, 8
        %v1290 = vpop.permute.xlu0 %1289
        %1291 = vrot.lane.b32.xlu0 %v1155, 8
        %v1292 = vpop.permute.xlu0 %1291
        %1293 = vrot.lane.b32.xlu0 %v1160, 8
        %v1294 = vpop.permute.xlu0 %1293
        %1295 = vrot.lane.b32.xlu0 %v1165, 8
        %v1296 = vpop.permute.xlu0 %1295
        %vm1313 = vcmask 64512
        %v1314 = vsel %vm1313, %v1218, %v1266
        %v1315 = vsel %vm1313, %v1220, %v1268
        %v1316 = vsel %vm1313, %v1222, %v1270
        %v1317 = vsel %vm1313, %v1224, %v1272
        %v1318 = vsel %vm1313, %v1226, %v1274
        %v1319 = vsel %vm1313, %v1228, %v1276
        %v1320 = vsel %vm1313, %v1230, %v1278
        %v1321 = vsel %vm1313, %v1232, %v1280
        %v1322 = vsel %vm1313, %v1234, %v1282
        %v1323 = vsel %vm1313, %v1236, %v1284
        %v1324 = vsel %vm1313, %v1238, %v1286
        %v1325 = vsel %vm1313, %v1240, %v1288
        %v1326 = vsel %vm1313, %v1242, %v1290
        %v1327 = vsel %vm1313, %v1244, %v1292
        %v1328 = vsel %vm1313, %v1246, %v1294
        %v1329 = vsel %vm1313, %v1248, %v1296
        %s1330 = scalar_lea.vmem [#allocation14], %s945
        %v1331 = vld [vmem:[%s1330] sm:$0xff]
        %v1332 = vld [vmem:[%s1330 + $0x8] sm:$0xff]
        %v1333 = vld [vmem:[%s1330 + $0x10] sm:$0xff]
        %v1334 = vld [vmem:[%s1330 + $0x18] sm:$0xff]
        %v1335 = vld [vmem:[%s1330 + $0x20] sm:$0xff]
        %v1336 = vld [vmem:[%s1330 + $0x28] sm:$0xff]
        %v1337 = vld [vmem:[%s1330 + $0x30] sm:$0xff]
        %v1338 = vld [vmem:[%s1330 + $0x38] sm:$0xff]
        %v1339 = vld [vmem:[%s1330 + $0x40] sm:$0xff]
        %v1340 = vld [vmem:[%s1330 + $0x48] sm:$0xff]
        %v1341 = vld [vmem:[%s1330 + $0x50] sm:$0xff]
        %v1342 = vld [vmem:[%s1330 + $0x58] sm:$0xff]
        %v1343 = vld [vmem:[%s1330 + $0x60] sm:$0xff]
        %v1344 = vld [vmem:[%s1330 + $0x68] sm:$0xff]
        %v1345 = vld [vmem:[%s1330 + $0x70] sm:$0xff]
        %v1346 = vld [vmem:[%s1330 + $0x78] sm:$0xff]
        %v1347 = vmul.f32 %v1314, %v1331
        %v1348 = vmul.f32 %v1315, %v1332
        %v1349 = vmul.f32 %v1316, %v1333
        %v1350 = vmul.f32 %v1317, %v1334
        %v1351 = vmul.f32 %v1318, %v1335
        %v1352 = vmul.f32 %v1319, %v1336
        %v1353 = vmul.f32 %v1320, %v1337
        %v1354 = vmul.f32 %v1321, %v1338
        %v1355 = vmul.f32 %v1322, %v1339
        %v1356 = vmul.f32 %v1323, %v1340
        %v1357 = vmul.f32 %v1324, %v1341
        %v1358 = vmul.f32 %v1325, %v1342
        %v1359 = vmul.f32 %v1326, %v1343
        %v1360 = vmul.f32 %v1327, %v1344
        %v1361 = vmul.f32 %v1328, %v1345
        %v1362 = vmul.f32 %v1329, %v1346
        %v1363 = vadd.f32 %v1185, %v1347
        %v1364 = vadd.f32 %v1186, %v1348
        %v1365 = vadd.f32 %v1187, %v1349
        %v1366 = vadd.f32 %v1188, %v1350
        %v1367 = vadd.f32 %v1189, %v1351
        %v1368 = vadd.f32 %v1190, %v1352
        %v1369 = vadd.f32 %v1191, %v1353
        %v1370 = vadd.f32 %v1192, %v1354
        %v1371 = vadd.f32 %v1193, %v1355
        %v1372 = vadd.f32 %v1194, %v1356
        %v1373 = vadd.f32 %v1195, %v1357
        %v1374 = vadd.f32 %v1196, %v1358
        %v1375 = vadd.f32 %v1197, %v1359
        %v1376 = vadd.f32 %v1198, %v1360
        %v1377 = vadd.f32 %v1199, %v1361
        %v1378 = vadd.f32 %v1200, %v1362
        %v1379 = vld [vmem:[#allocation2] sm:$0xff]
        %v1380 = vld [vmem:[#allocation2 + $0x8] sm:$0xff]
        %v1381 = vld [vmem:[#allocation2 + $0x10] sm:$0xff]
        %v1382 = vld [vmem:[#allocation2 + $0x18] sm:$0xff]
        %v1383 = vld [vmem:[#allocation2 + $0x20] sm:$0xff]
        %v1384 = vld [vmem:[#allocation2 + $0x28] sm:$0xff]
        %v1385 = vld [vmem:[#allocation2 + $0x30] sm:$0xff]
        %v1386 = vld [vmem:[#allocation2 + $0x38] sm:$0xff]
        %v1387 = vld [vmem:[#allocation2 + $0x40] sm:$0xff]
        %v1388 = vld [vmem:[#allocation2 + $0x48] sm:$0xff]
        %v1389 = vld [vmem:[#allocation2 + $0x50] sm:$0xff]
        %v1390 = vld [vmem:[#allocation2 + $0x58] sm:$0xff]
        %v1391 = vld [vmem:[#allocation2 + $0x60] sm:$0xff]
        %v1392 = vld [vmem:[#allocation2 + $0x68] sm:$0xff]
        %v1393 = vld [vmem:[#allocation2 + $0x70] sm:$0xff]
        %v1394 = vld [vmem:[#allocation2 + $0x78] sm:$0xff]
        %vm1395 = vcmask 130048
        %v1397 = vsel %vm1395, %v1363, 0
        %v1400 = vsel %vm1395, %v1364, 0
        %v1403 = vsel %vm1395, %v1365, 0
        %v1406 = vsel %vm1395, %v1366, 0
        %v1409 = vsel %vm1395, %v1367, 0
        %v1412 = vsel %vm1395, %v1368, 0
        %v1415 = vsel %vm1395, %v1369, 0
        %v1418 = vsel %vm1395, %v1370, 0
        %v1421 = vsel %vm1395, %v1371, 0
        %v1424 = vsel %vm1395, %v1372, 0
        %v1427 = vsel %vm1395, %v1373, 0
        %v1430 = vsel %vm1395, %v1374, 0
        %v1433 = vsel %vm1395, %v1375, 0
        %v1436 = vsel %vm1395, %v1376, 0
        %v1439 = vsel %vm1395, %v1377, 0
        %v1442 = vsel %vm1395, %v1378, 0
        %v1445 = vsel %vm1395, %v1379, 0
        %v1448 = vsel %vm1395, %v1380, 0
        %v1451 = vsel %vm1395, %v1381, 0
        %v1454 = vsel %vm1395, %v1382, 0
        %v1457 = vsel %vm1395, %v1383, 0
        %v1460 = vsel %vm1395, %v1384, 0
        %v1463 = vsel %vm1395, %v1385, 0
        %v1466 = vsel %vm1395, %v1386, 0
        %v1469 = vsel %vm1395, %v1387, 0
        %v1472 = vsel %vm1395, %v1388, 0
        %v1475 = vsel %vm1395, %v1389, 0
        %v1478 = vsel %vm1395, %v1390, 0
        %v1481 = vsel %vm1395, %v1391, 0
        %v1484 = vsel %vm1395, %v1392, 0
        %v1487 = vsel %vm1395, %v1393, 0
        %v1490 = vsel %vm1395, %v1394, 0
        %1492 = vmatprep.subr.mxu0 0.0
        %1493 = vmatpush1.xpose.msra.mxu0 %v1445
        %1494 = vmatprep.subr.mxu0 0.0
        %1495 = vmatpush1.xpose.msra.mxu0 %v1448
        %1496 = vmatprep.subr.mxu0 0.0
        %1497 = vmatpush1.xpose.msra.mxu0 %v1451
        %1498 = vmatprep.subr.mxu0 0.0
        %1499 = vmatpush1.xpose.msra.mxu0 %v1454
        %1500 = vmatprep.subr.mxu0 0.0
        %1501 = vmatpush1.xpose.msra.mxu0 %v1457
        %1502 = vmatprep.subr.mxu0 0.0
        %1503 = vmatpush1.xpose.msra.mxu0 %v1460
        %1504 = vmatprep.subr.mxu0 0.0
        %1505 = vmatpush1.xpose.msra.mxu0 %v1463
        %1506 = vmatprep.subr.mxu0 0.0
        %1507 = vmatpush1.xpose.msra.mxu0 %v1466
        %1508 = vmatprep.subr.mxu0 0.0
        %1509 = vmatpush1.xpose.msra.mxu0 %v1469
        %1510 = vmatprep.subr.mxu0 0.0
        %1511 = vmatpush1.xpose.msra.mxu0 %v1472
        %1512 = vmatprep.subr.mxu0 0.0
        %1513 = vmatpush1.xpose.msra.mxu0 %v1475
        %1514 = vmatprep.subr.mxu0 0.0
        %1515 = vmatpush1.xpose.msra.mxu0 %v1478
        %1516 = vmatprep.subr.mxu0 0.0
        %1517 = vmatpush1.xpose.msra.mxu0 %v1481
        %1518 = vmatprep.subr.mxu0 0.0
        %1519 = vmatpush1.xpose.msra.mxu0 %v1484
        %1520 = vmatprep.subr.mxu0 0.0
        %1521 = vmatpush1.xpose.msra.mxu0 %v1487
        %1522 = vmatprep.subr.mxu0 0.0
        %1523 = vmatpush1.xpose.msra.mxu0 %v1490
        %1524 = vmatprep.subr.mxu0 0.0
        %1525 = vmatpush1.xpose.msra.mxu0 0.0
        %1526 = vmatprep.subr.mxu0 0.0
        %1527 = vmatpush1.xpose.msra.mxu0 0.0
        %1528 = vmatprep.subr.mxu0 0.0
        %1529 = vmatpush1.xpose.msra.mxu0 0.0
        %1530 = vmatprep.subr.mxu0 0.0
        %1531 = vmatpush1.xpose.msra.mxu0 0.0
        %1532 = vmatprep.subr.mxu0 0.0
        %1533 = vmatpush1.xpose.msra.mxu0 0.0
        %1534 = vmatprep.subr.mxu0 0.0
        %1535 = vmatpush1.xpose.msra.mxu0 0.0
        %1536 = vmatprep.subr.mxu0 0.0
        %1537 = vmatpush1.xpose.msra.mxu0 0.0
        %1538 = vmatprep.subr.mxu0 0.0
        %1539 = vmatpush1.xpose.msra.mxu0 0.0
        %1540 = vmatprep.subr.mxu0 0.0
        %1541 = vmatpush1.xpose.msra.mxu0 0.0
        %1542 = vmatprep.subr.mxu0 0.0
        %1543 = vmatpush1.xpose.msra.mxu0 0.0
        %1544 = vmatprep.subr.mxu0 0.0
        %1545 = vmatpush1.xpose.msra.mxu0 0.0
        %1546 = vmatprep.subr.mxu0 0.0
        %1547 = vmatpush1.xpose.msra.mxu0 0.0
        %1548 = vmatprep.subr.mxu0 0.0
        %1549 = vmatpush1.xpose.msra.mxu0 0.0
        %1550 = vmatprep.subr.mxu0 0.0
        %1551 = vmatpush1.xpose.msra.mxu0 0.0
        %1552 = vmatprep.subr.mxu0 0.0
        %1553 = vmatpush1.xpose.msra.mxu0 0.0
        %1554 = vmatprep.subr.mxu0 0.0
        %1555 = vmatpush1.xpose.msra.mxu0 0.0
        %1556 = vmatprep.mubr.f32.mxu0 0.0
        %1557 = vmatmul.mubr.f32.gmra.mrb[0].mxu0 %v1397
        %v1558 = vpop.f32.mrb[0].mxu0
        %v1559 = vadd.f32 0.0, %v1558
        %v1560 = vpop.f32.mrb[0].mxu0
        %1561 = vmatprep.mubr.f32.mxu0 0.0
        %1562 = vmatmul.mubr.f32.gmra.mrb[0].mxu0 %v1400
        %v1563 = vpop.f32.mrb[0].mxu0
        %v1564 = vadd.f32 0.0, %v1563
        %v1565 = vpop.f32.mrb[0].mxu0
        %1566 = vmatprep.mubr.f32.mxu0 0.0
        %1567 = vmatmul.mubr.f32.gmra.mrb[0].mxu0 %v1403
        %v1568 = vpop.f32.mrb[0].mxu0
        %v1569 = vadd.f32 0.0, %v1568
        %v1570 = vpop.f32.mrb[0].mxu0
        %1571 = vmatprep.mubr.f32.mxu0 0.0
        %1572 = vmatmul.mubr.f32.gmra.mrb[0].mxu0 %v1406
        %v1573 = vpop.f32.mrb[0].mxu0
        %v1574 = vadd.f32 0.0, %v1573
        %v1575 = vpop.f32.mrb[0].mxu0
        %1576 = vmatprep.mubr.f32.mxu0 0.0
        %1577 = vmatmul.mubr.f32.gmra.mrb[0].mxu0 %v1409
        %v1578 = vpop.f32.mrb[0].mxu0
        %v1579 = vadd.f32 0.0, %v1578
        %v1580 = vpop.f32.mrb[0].mxu0
        %1581 = vmatprep.mubr.f32.mxu0 0.0
        %1582 = vmatmul.mubr.f32.gmra.mrb[0].mxu0 %v1412
        %v1583 = vpop.f32.mrb[0].mxu0
        %v1584 = vadd.f32 0.0, %v1583
        %v1585 = vpop.f32.mrb[0].mxu0
        %1586 = vmatprep.mubr.f32.mxu0 0.0
        %1587 = vmatmul.mubr.f32.gmra.mrb[0].mxu0 %v1415
        %v1588 = vpop.f32.mrb[0].mxu0
        %v1589 = vadd.f32 0.0, %v1588
        %v1590 = vpop.f32.mrb[0].mxu0
        %1591 = vmatprep.mubr.f32.mxu0 0.0
        %1592 = vmatmul.mubr.f32.gmra.mrb[0].mxu0 %v1418
        %v1593 = vpop.f32.mrb[0].mxu0
        %v1594 = vadd.f32 0.0, %v1593
        %v1595 = vpop.f32.mrb[0].mxu0
        %1596 = vmatprep.mubr.f32.mxu0 0.0
        %1597 = vmatmul.mubr.f32.gmra.mrb[0].mxu0 %v1421
        %v1598 = vpop.f32.mrb[0].mxu0
        %v1599 = vadd.f32 0.0, %v1598
        %v1600 = vpop.f32.mrb[0].mxu0
        %1601 = vmatprep.mubr.f32.mxu0 0.0
        %1602 = vmatmul.mubr.f32.gmra.mrb[0].mxu0 %v1424
        %v1603 = vpop.f32.mrb[0].mxu0
        %v1604 = vadd.f32 0.0, %v1603
        %v1605 = vpop.f32.mrb[0].mxu0
        %1606 = vmatprep.mubr.f32.mxu0 0.0
        %1607 = vmatmul.mubr.f32.gmra.mrb[0].mxu0 %v1427
        %v1608 = vpop.f32.mrb[0].mxu0
        %v1609 = vadd.f32 0.0, %v1608
        %v1610 = vpop.f32.mrb[0].mxu0
        %1611 = vmatprep.mubr.f32.mxu0 0.0
        %1612 = vmatmul.mubr.f32.gmra.mrb[0].mxu0 %v1430
        %v1613 = vpop.f32.mrb[0].mxu0
        %v1614 = vadd.f32 0.0, %v1613
        %v1615 = vpop.f32.mrb[0].mxu0
        %1616 = vmatprep.mubr.f32.mxu0 0.0
        %1617 = vmatmul.mubr.f32.gmra.mrb[0].mxu0 %v1433
        %v1618 = vpop.f32.mrb[0].mxu0
        %v1619 = vadd.f32 0.0, %v1618
        %v1620 = vpop.f32.mrb[0].mxu0
        %1621 = vmatprep.mubr.f32.mxu0 0.0
        %1622 = vmatmul.mubr.f32.gmra.mrb[0].mxu0 %v1436
        %v1623 = vpop.f32.mrb[0].mxu0
        %v1624 = vadd.f32 0.0, %v1623
        %v1625 = vpop.f32.mrb[0].mxu0
        %1626 = vmatprep.mubr.f32.mxu0 0.0
        %1627 = vmatmul.mubr.f32.gmra.mrb[0].mxu0 %v1439
        %v1628 = vpop.f32.mrb[0].mxu0
        %v1629 = vadd.f32 0.0, %v1628
        %v1630 = vpop.f32.mrb[0].mxu0
        %1631 = vmatprep.mubr.f32.mxu0 0.0
        %1632 = vmatmul.mubr.f32.gmra.mrb[0].mxu0 %v1442
        %v1633 = vpop.f32.mrb[0].mxu0
        %v1634 = vadd.f32 0.0, %v1633
        %v1635 = vpop.f32.mrb[0].mxu0
        %1636 = vdwg.mxu0
        %1637 = vst [vmem:[%s490] sm:$0xff] %v1559
        %1638 = vst [vmem:[%s490 + $0x8] sm:$0xff] %v1564
        %1639 = vst [vmem:[%s490 + $0x10] sm:$0xff] %v1569
        %1640 = vst [vmem:[%s490 + $0x18] sm:$0xff] %v1574
        %1641 = vst [vmem:[%s490 + $0x20] sm:$0xff] %v1579
        %1642 = vst [vmem:[%s490 + $0x28] sm:$0xff] %v1584
        %1643 = vst [vmem:[%s490 + $0x30] sm:$0xff] %v1589
        %1644 = vst [vmem:[%s490 + $0x38] sm:$0xff] %v1594
        %1645 = vst [vmem:[%s490 + $0x40] sm:$0xff] %v1599
        %1646 = vst [vmem:[%s490 + $0x48] sm:$0xff] %v1604
        %1647 = vst [vmem:[%s490 + $0x50] sm:$0xff] %v1609
        %1648 = vst [vmem:[%s490 + $0x58] sm:$0xff] %v1614
        %1649 = vst [vmem:[%s490 + $0x60] sm:$0xff] %v1619
        %1650 = vst [vmem:[%s490 + $0x68] sm:$0xff] %v1624
        %1651 = vst [vmem:[%s490 + $0x70] sm:$0xff] %v1629
        %1652 = vst [vmem:[%s490 + $0x78] sm:$0xff] %v1634
        %s1653 = sand.u32 %s234, 1
        %s1654 = scalar_lea.sflag [#allocation5], %s1653
        %s1655 = sand.u32 %s234, 1
        %s1656 = smul.addr %s1655, 128
        %s1657 = scalar_lea.vmem [#allocation15], %s1656
        // Predicated region
        $region81: #{tpu_custom_call.1} parent=47 // pred_check
          %p1658 = pneg %p244
        $region82: #{tpu_custom_call.1} parent=47 // pred_check_branch
          %1660 = sbr.rel (%p1658) target = $region84
        $region83: #{tpu_custom_call.1} parent=47 // pred_region
          %s1661 = smul.u32 16, %s38
          %s1662 = ssub.s32 1, %s1661
          %s1663 = smul.u32 128, %s1662
          %s1665 = ssub.s32 2048, %s1663
          %1666 = vsyncadd %s1654, %s1665
          %p1667 = scmp.ne.s32.totalorder 0, %s1663
          %s1668 = sadd.s32 %s1661, %s37
          %s1669 = smul.addr %s36, 4
          %s1670 = sadd.s32 %s1668, %s1669
          %s1671 = smul.addr %s1670, 128
          %s1672 = scalar_lea.hbm %s7, %s1671
          %s1673 = smul.u32 8, %s1662
          %s1674 = sshll.u32 %s1657, 4
          %s1675 = int_to_ptr.vmem [resolvable:$true] %s1674
          %s1676 = sshll.u32 %s1673, 4
          %1680 = dma.vmem_to_hbm [thread:$0]  (%p1667), %s1675, %s1676, %s1672, %s1654, 128, 128, 8
        $region84: #{tpu_custom_call.1} parent=47 // pred_fallthru
          _
      $region48: #{tpu_custom_call.1} parent=5 // pred_fallthru
        _
      %p1681 = scmp.le.s32.totalorder 2, %s26
      // Predicated region
      $region85: #{tpu_custom_call.1} parent=5 // pred_check
        %p1682 = pneg %p1681
      $region86: #{tpu_custom_call.1} parent=5 // pred_check_branch
        %1684 = sbr.rel (%p1682) target = $region88
      $region87: #{tpu_custom_call.1} parent=5 // pred_region
        %s1685 = ssub.s32 %s26, 2
        // Predicated region
        $region89: #{tpu_custom_call.1} parent=87 // pred_check
          %p1686 = pneg %p250
        $region90: #{tpu_custom_call.1} parent=87 // pred_check_branch
          %1688 = sbr.rel (%p1686) target = $region92
        $region91: #{tpu_custom_call.1} parent=87 // pred_region
          %s1689 = sand.u32 %s235, 1
          %s1690 = scalar_lea.sflag [#allocation5], %s1689
          %s1691 = sand.u32 %s235, 1
          %s1692 = smul.addr %s1691, 128
          %s1693 = scalar_lea.vmem [#allocation15], %s1692
          %1694 = dma.done %s1690, 2048
        $region92: #{tpu_custom_call.1} parent=87 // pred_fallthru
          _
      $region88: #{tpu_custom_call.1} parent=5 // pred_fallthru
        _
    $region6: #{tpu_custom_call.1} parent=1 // loop_footer
      %s30 = sadd.s32 1, %s26
    $region7: #{tpu_custom_call.1} parent=1 // loop_footer_branch
      %25 = sbr.rel target = $region3
    $region8: #{tpu_custom_call.1} parent=1 // loop_exit
      _
    %1695 = vsyncpa [#allocation4], 1
    %s1696 = scalar_lea.sflag [#allocation4], 1
    %1697 = vsyncpa %s1696, 1
    %1698 = vsyncpa [#allocation7], 1
    %s1699 = scalar_lea.sflag [#allocation7], 1
    %1700 = vsyncpa %s1699, 1
    %1701 = vsyncpa [#allocation10], 1
    %s1702 = scalar_lea.sflag [#allocation10], 1
    %1703 = vsyncpa %s1702, 1
    %1704 = vsyncpa [#allocation13], 1
    %1705 = vsyncpa [#allocation5], 1
    %s1706 = scalar_lea.sflag [#allocation5], 1
    %1707 = vsyncpa %s1706, 1

</llo_original>
